<compile_context>
chip_gen: v7x
topology: tpu7x:2x2x1
jax: 0.10.0
libtpu: 0.0.40
codegen_flags: <defaults>
</compile_context>

<pallas_src>
import functools

import jax
import jax.numpy as jnp
from jax import lax
from jax.experimental import pallas as pl
from jax.experimental.pallas import tpu as pltpu


_COMPUTE_DTYPE = jnp.bfloat16            # matmul operand / activation dtype
_VMEM_LIMIT = 32 * 1024 * 1024           # explicit scoped-VMEM budget (safe on v5e/v6e/v7x)


# ---------------------------------------------------------------------------
# tiling helpers (tile sizes must divide the dim and satisfy the (8,128) rule)
# ---------------------------------------------------------------------------

def _row_tile(m, target=256):
    """Largest multiple of 8 that divides m and is <= target (else m itself)."""
    if m <= target:
        return m
    for t in range(target, 0, -8):
        if m % t == 0:
            return t
    return m


def _k_tile(k, target=512):
    """Largest multiple of 128 that divides k and is <= target (else k itself)."""
    if k <= target:
        return k
    for t in range(target, 0, -128):
        if k % t == 0:
            return t
    return k


# ---------------------------------------------------------------------------
# Pallas kernels
# ---------------------------------------------------------------------------

def _linear_kernel(x_ref, w_ref, b_ref, o_ref, acc_ref):
    # o = x @ w + b ;  grid = (m_tiles, k_tiles), f32 accumulator across k.
    k = pl.program_id(1)

    @pl.when(k == 0)
    def _():
        acc_ref[...] = jnp.zeros_like(acc_ref)

    acc_ref[...] += jnp.dot(x_ref[...], w_ref[...],
                            preferred_element_type=jnp.float32)

    @pl.when(k == pl.num_programs(1) - 1)
    def _():
        o_ref[...] = (acc_ref[...] + b_ref[...]).astype(o_ref.dtype)


def _ln_qkv_kernel(x_ref, g_ref, bln_ref, w_ref, b_ref, q_ref, k_ref, v_ref, *, inner):
    # fused LayerNorm (f32) + qkv projection (bf16 MXU, f32 acc); writes q / k / v
    # as three contiguous (tm, inner) outputs so no wrapper transposes are needed.
    x = x_ref[...].astype(jnp.float32)
    mu = jnp.mean(x, axis=-1, keepdims=True)
    var = jnp.mean((x - mu) * (x - mu), axis=-1, keepdims=True)
    xn = (x - mu) * lax.rsqrt(var + 1e-5)
    xn = xn * g_ref[...] + bln_ref[...]
    h = jnp.dot(xn.astype(w_ref.dtype), w_ref[...],
                preferred_element_type=jnp.float32) + b_ref[...]
    h = h.astype(q_ref.dtype)
    q_ref[...] = h[:, :inner]
    k_ref[...] = h[:, inner:2 * inner]
    v_ref[...] = h[:, 2 * inner:]


def _flash_attn_kernel(q_ref, k_ref, v_ref, o_ref, m_sc, l_sc, acc_sc, *, heads, dim_head):
    # flash-style attention: grid = (B, q_tiles, kv_tiles); all heads per block.
    # The 1/sqrt(dim_head) scale is already folded into the q projection weights.
    # TODO(synk): mask is always None at the mixecn call site; additive masking not wired in.
    ki = pl.program_id(2)

    @pl.when(ki == 0)
    def _():
        m_sc[...] = jnp.full_like(m_sc, -jnp.inf)
        l_sc[...] = jnp.zeros_like(l_sc)
        acc_sc[...] = jnp.zeros_like(acc_sc)

    q = q_ref[0]          # (tq,  heads*dh) bf16
    k = k_ref[0]          # (tkv, heads*dh) bf16
    v = v_ref[0]          # (tkv, heads*dh) bf16

    for h in range(heads):                                     # static unroll
        d0 = h * dim_head
        q_h = q[:, d0:d0 + dim_head]                           # (tq,  dh)
        k_h = k[:, d0:d0 + dim_head]                           # (tkv, dh)
        v_h = v[:, d0:d0 + dim_head]                           # (tkv, dh)

        # q_h @ k_h^T on the MXU without materializing a transpose (NT dims).
        s = lax.dot_general(q_h, k_h, (((1,), (1,)), ((), ())),
                            preferred_element_type=jnp.float32)   # (tq, tkv)

        hcol = pl.ds(h, 1)
        dcol = pl.ds(d0, dim_head)
        m_prev = m_sc[:, hcol]                                  # (tq, 1)
        m_new = jnp.maximum(m_prev, jnp.max(s, axis=-1, keepdims=True))
        alpha = jnp.exp(m_prev - m_new)
        p = jnp.exp(s - m_new)
        l_sc[:, hcol] = alpha * l_sc[:, hcol] + jnp.sum(p, axis=-1, keepdims=True)
        acc_sc[:, dcol] = alpha * acc_sc[:, dcol] + jnp.dot(
            p.astype(v_h.dtype), v_h, preferred_element_type=jnp.float32)
        m_sc[:, hcol] = m_new

    @pl.when(ki == pl.num_programs(2) - 1)
    def _():
        inv_l = pl.reciprocal(l_sc[...], approx=True)           # (tq, heads), EUP
        parts = [acc_sc[:, pl.ds(h * dim_head, dim_head)] * inv_l[:, h:h + 1]
                 for h in range(heads)]
        o_ref[0] = jnp.concatenate(parts, axis=-1).astype(o_ref.dtype)


def _proj_residual_kernel(a_ref, w_ref, b_ref, res_ref, o_ref):
    # fused out-projection + residual add: o = res + a @ w + b
    y = jnp.dot(a_ref[...], w_ref[...], preferred_element_type=jnp.float32)
    o_ref[...] = (y + b_ref[...] + res_ref[...].astype(jnp.float32)).astype(o_ref.dtype)


def _ln_ffn_residual_kernel(x_ref, g_ref, bln_ref, w1_ref, b1_ref, w2_ref, b2_ref, o_ref):
    # fused LayerNorm + GELU-MLP + residual:  o = x + W2 @ gelu(W1 @ LN(x) + b1) + b2
    x = x_ref[...].astype(jnp.float32)
    mu = jnp.mean(x, axis=-1, keepdims=True)
    var = jnp.mean((x - mu) * (x - mu), axis=-1, keepdims=True)
    xn = (x - mu) * lax.rsqrt(var + 1e-5)
    xn = xn * g_ref[...] + bln_ref[...]
    h = jnp.dot(xn.astype(w1_ref.dtype), w1_ref[...],
                preferred_element_type=jnp.float32) + b1_ref[...]
    # TODO(synk): torch nn.GELU defaults to exact erf; tanh approximation used here for
    #             guaranteed Mosaic lowering (numerical difference is ~1e-3 relative).
    h = jax.nn.gelu(h)
    y = jnp.dot(h.astype(w2_ref.dtype), w2_ref[...],
                preferred_element_type=jnp.float32) + b2_ref[...]
    o_ref[...] = (y + x).astype(o_ref.dtype)


# ---------------------------------------------------------------------------
# Pallas wrappers (grids / BlockSpecs)
# ---------------------------------------------------------------------------

def pallas_linear(x2d, w, b):
    M, K = x2d.shape
    N = w.shape[1]
    tm, tk = _row_tile(M), _k_tile(K)
    return pl.pallas_call(
        _linear_kernel,
        out_shape=jax.ShapeDtypeStruct((M, N), x2d.dtype),
        grid=(M // tm, K // tk),
        in_specs=[
            pl.BlockSpec((tm, tk), lambda i, k: (i, k)),
            pl.BlockSpec((tk, N), lambda i, k: (k, 0)),     # weight resident across M
            pl.BlockSpec((1, N), lambda i, k: (0, 0)),
        ],
        out_specs=pl.BlockSpec((tm, N), lambda i, k: (i, 0)),
        scratch_shapes=[pltpu.VMEM((tm, N), jnp.float32)],
        compiler_params=pltpu.CompilerParams(
            dimension_semantics=("parallel", "arbitrary"),
            vmem_limit_bytes=_VMEM_LIMIT),
    )(x2d, w, b.reshape(1, N).astype(jnp.float32))


def pallas_ln_qkv(x2d, gamma, beta, w, b, inner):
    M, D = x2d.shape
    tm = _row_tile(M)
    kern = functools.partial(_ln_qkv_kernel, inner=inner)
    out_sd = jax.ShapeDtypeStruct((M, inner), x2d.dtype)
    out_spec = pl.BlockSpec((tm, inner), lambda i: (i, 0))
    return pl.pallas_call(
        kern,
        out_shape=(out_sd, out_sd, out_sd),
        grid=(M // tm,),
        in_specs=[
            pl.BlockSpec((tm, D), lambda i: (i, 0)),
            pl.BlockSpec((1, D), lambda i: (0, 0)),
            pl.BlockSpec((1, D), lambda i: (0, 0)),
            pl.BlockSpec((D, 3 * inner), lambda i: (0, 0)),
            pl.BlockSpec((1, 3 * inner), lambda i: (0, 0)),
        ],
        out_specs=(out_spec, out_spec, out_spec),
        compiler_params=pltpu.CompilerParams(
            dimension_semantics=("parallel",),
            vmem_limit_bytes=_VMEM_LIMIT),
    )(x2d, gamma.reshape(1, D).astype(jnp.float32),
      beta.reshape(1, D).astype(jnp.float32),
      w, b.reshape(1, 3 * inner).astype(jnp.float32))


def pallas_attention(q, k, v, heads, dim_head):
    # q, k, v: (B, N, heads*dim_head), heads packed contiguously along the last axis.
    B, N, inner = q.shape
    tq = _row_tile(N, 256)
    tkv = _row_tile(N, 512)
    kern = functools.partial(_flash_attn_kernel, heads=heads, dim_head=dim_head)
    q_spec = pl.BlockSpec((1, tq, inner), lambda b, qi, ki: (b, qi, 0))
    kv_spec = pl.BlockSpec((1, tkv, inner), lambda b, qi, ki: (b, ki, 0))
    return pl.pallas_call(
        kern,
        out_shape=jax.ShapeDtypeStruct((B, N, inner), q.dtype),
        grid=(B, N // tq, N // tkv),
        in_specs=[q_spec, kv_spec, kv_spec],
        out_specs=pl.BlockSpec((1, tq, inner), lambda b, qi, ki: (b, qi, 0)),
        scratch_shapes=[
            pltpu.VMEM((tq, heads), jnp.float32),    # running max  m
            pltpu.VMEM((tq, heads), jnp.float32),    # running sum  l
            pltpu.VMEM((tq, inner), jnp.float32),    # output accumulator
        ],
        compiler_params=pltpu.CompilerParams(
            dimension_semantics=("parallel", "parallel", "arbitrary"),
            vmem_limit_bytes=_VMEM_LIMIT),
    )(q, k, v)


def pallas_proj_residual(a2d, w, b, res2d):
    M, K = a2d.shape
    N = w.shape[1]
    tm = _row_tile(M)
    return pl.pallas_call(
        _proj_residual_kernel,
        out_shape=jax.ShapeDtypeStruct((M, N), res2d.dtype),
        grid=(M // tm,),
        in_specs=[
            pl.BlockSpec((tm, K), lambda i: (i, 0)),
            pl.BlockSpec((K, N), lambda i: (0, 0)),
            pl.BlockSpec((1, N), lambda i: (0, 0)),
            pl.BlockSpec((tm, N), lambda i: (i, 0)),
        ],
        out_specs=pl.BlockSpec((tm, N), lambda i: (i, 0)),
        compiler_params=pltpu.CompilerParams(
            dimension_semantics=("parallel",),
            vmem_limit_bytes=_VMEM_LIMIT),
    )(a2d, w, b.reshape(1, N).astype(jnp.float32), res2d)


def pallas_ln_ffn_residual(x2d, gamma, beta, w1, b1, w2, b2):
    M, D = x2d.shape
    H = w1.shape[1]
    tm = _row_tile(M)
    return pl.pallas_call(
        _ln_ffn_residual_kernel,
        out_shape=jax.ShapeDtypeStruct((M, D), x2d.dtype),
        grid=(M // tm,),
        in_specs=[
            pl.BlockSpec((tm, D), lambda i: (i, 0)),
            pl.BlockSpec((1, D), lambda i: (0, 0)),
            pl.BlockSpec((1, D), lambda i: (0, 0)),
            pl.BlockSpec((D, H), lambda i: (0, 0)),
            pl.BlockSpec((1, H), lambda i: (0, 0)),
            pl.BlockSpec((H, D), lambda i: (0, 0)),
            pl.BlockSpec((1, D), lambda i: (0, 0)),
        ],
        out_specs=pl.BlockSpec((tm, D), lambda i: (i, 0)),
        compiler_params=pltpu.CompilerParams(
            dimension_semantics=("parallel",),
            vmem_limit_bytes=_VMEM_LIMIT),
    )(x2d, gamma.reshape(1, D).astype(jnp.float32),
      beta.reshape(1, D).astype(jnp.float32),
      w1, b1.reshape(1, H).astype(jnp.float32),
      w2, b2.reshape(1, D).astype(jnp.float32))


# ---------------------------------------------------------------------------
# mixecn model (parameter init + forward glue)
# ---------------------------------------------------------------------------

def init_params(key, indim, outdim, dim, lays, heads, dim_head, hidden_dim):
    inner = heads * dim_head
    scale = 1.0 / float(dim_head) ** 0.5

    def dense(k, fan_in, fan_out):
        kw, kb = jax.random.split(k)
        s = 1.0 / jnp.sqrt(fan_in)
        w = jax.random.uniform(kw, (fan_in, fan_out), jnp.float32, -s, s)
        b = jax.random.uniform(kb, (fan_out,), jnp.float32, -s, s)
        return w, b

    keys = jax.random.split(key, 2 + lays)
    params = {}
    if indim != dim:
        w, b = dense(keys[0], indim, dim)
        params["inl"] = (w.astype(_COMPUTE_DTYPE), b)
    else:
        params["inl"] = None
    if outdim != dim:
        w, b = dense(keys[1], dim, outdim)
        params["outl"] = (w.astype(_COMPUTE_DTYPE), b)
    else:
        params["outl"] = None

    layers = []
    for li in range(lays):
        lk = jax.random.split(keys[2 + li], 4)
        wqkv, bqkv = dense(lk[0], dim, 3 * inner)
        # fold the 1/sqrt(dim_head) attention scale into the q slice of the qkv proj
        wqkv = wqkv.at[:, :inner].multiply(scale)
        bqkv = bqkv.at[:inner].multiply(scale)
        wout, bout = dense(lk[1], inner, dim)
        w1, b1 = dense(lk[2], dim, hidden_dim)
        w2, b2 = dense(lk[3], hidden_dim, dim)
        layers.append({
            "ln1_g": jnp.ones((dim,), jnp.float32),
            "ln1_b": jnp.zeros((dim,), jnp.float32),
            "qkv": (wqkv.astype(_COMPUTE_DTYPE), bqkv),
            "out": (wout.astype(_COMPUTE_DTYPE), bout),
            "ln2_g": jnp.ones((dim,), jnp.float32),
            "ln2_b": jnp.zeros((dim,), jnp.float32),
            "ffn1": (w1.astype(_COMPUTE_DTYPE), b1),
            "ffn2": (w2.astype(_COMPUTE_DTYPE), b2),
        })
    params["layers"] = layers
    return params


def attn_layer_forward(x, p, heads, dim_head, mask=None):
    # x: (B, N, dim)
    B, N, dim = x.shape
    inner = heads * dim_head
    x2d = x.reshape(B * N, dim)

    # --- pre-norm MHSA: fused LN1 + qkv projection, flash attention, fused out+residual
    q2d, k2d, v2d = pallas_ln_qkv(x2d, p["ln1_g"], p["ln1_b"],
                                  p["qkv"][0], p["qkv"][1], inner)
    o = pallas_attention(q2d.reshape(B, N, inner),     # free reshapes, no transposes
                         k2d.reshape(B, N, inner),
                         v2d.reshape(B, N, inner),
                         heads, dim_head)              # (B, N, inner), head-contiguous
    x2d = pallas_proj_residual(o.reshape(B * N, inner), p["out"][0], p["out"][1], x2d)

    # --- pre-norm FFN: fused LN2 + GELU-MLP + residual
    x2d = pallas_ln_ffn_residual(x2d, p["ln2_g"], p["ln2_b"],
                                 p["ffn1"][0], p["ffn1"][1],
                                 p["ffn2"][0], p["ffn2"][1])
    return x2d.reshape(B, N, dim)


def mixecn_forward(params, x, heads, dim_head, taskemb=None, mask=None):
    # x: (B, N, indim)
    B, N, _ = x.shape
    x = x.astype(_COMPUTE_DTYPE)

    if params["inl"] is not None:
        x = pallas_linear(x.reshape(B * N, x.shape[-1]), *params["inl"]).reshape(B, N, -1)

    for lp in params["layers"]:
        x = attn_layer_forward(x, lp, heads, dim_head, mask)

    if params["outl"] is not None:
        x = pallas_linear(x.reshape(B * N, x.shape[-1]), *params["outl"]).reshape(B, N, -1)

    return x


# ---------------------------------------------------------------------------
# main
# ---------------------------------------------------------------------------

if __name__ == "__main__":
    # small, forward-consistent shapes
    B, N = 2, 8
    indim, dim, outdim = 16, 32, 8
    lays, heads, dim_head, hidden_dim = 2, 4, 8, 64

    key = jax.random.PRNGKey(0)
    kx, kp = jax.random.split(key)

    x = jax.random.normal(kx, (B, N, indim), jnp.float32)
    params = init_params(kp, indim, outdim, dim, lays, heads, dim_head, hidden_dim)

    fwd = jax.jit(functools.partial(mixecn_forward, heads=heads, dim_head=dim_head))
    y = fwd(params, x)
    jax.block_until_ready(y)

    assert y.shape == (B, N, outdim), y.shape
    assert bool(jnp.all(jnp.isfinite(y.astype(jnp.float32))))
    print("KERNEL_OK")
</pallas_src>

<mosaic_0001>
module attributes {stable_mosaic.version = 11 : i64} {
  func.func @_linear_kernel(%arg0: i32, %arg1: i32, %arg2: memref<16x16xbf16, #tpu.memory_space<vmem>>, %arg3: memref<16x32xbf16, #tpu.memory_space<vmem>>, %arg4: memref<1x32xf32, #tpu.memory_space<vmem>>, %arg5: memref<16x32xbf16, #tpu.memory_space<vmem>>, %arg6: memref<16x32xf32, #tpu.memory_space<vmem>>) attributes {dimension_semantics = [#tpu.dimension_semantics<parallel>, #tpu.dimension_semantics<arbitrary>], iteration_bounds = array<i64: 1, 1>, scalar_prefetch = 0 : i64, scratch_operands = 1 : i64, tpu.core_type = #tpu.core_type<tc>, window_params = [{transform_indices = @transform_0, window_bounds = array<i64: 16, 16>}, {transform_indices = @transform_1, window_bounds = array<i64: 16, 32>}, {pipeline_mode = #tpu.pipeline_mode<synchronous>, transform_indices = @transform_2, window_bounds = array<i64: 1, 32>}, {transform_indices = @transform_3, window_bounds = array<i64: 16, 32>}]} {
    %c0_i32 = arith.constant 0 : i32
    %0 = arith.cmpi eq, %arg1, %c0_i32 : i32
    %1 = arith.extui %0 : i1 to i32
    %c0_i32_0 = arith.constant 0 : i32
    %2 = arith.cmpi ne, %1, %c0_i32_0 : i32
    scf.if %2 {
      %cst_10 = arith.constant 0.000000e+00 : f32
      %12 = vector.broadcast %cst_10 : f32 to vector<16x32xf32>
      %c0_11 = arith.constant 0 : index
      %c0_12 = arith.constant 0 : index
      %13 = vector.load %arg6[%c0_11, %c0_12] : memref<16x32xf32, #tpu.memory_space<vmem>>, vector<16x32xf32>
      tpu.vector_store %arg6[%c0_11, %c0_12], %12 {strides = array<i32>} : memref<16x32xf32, #tpu.memory_space<vmem>>, vector<16x32xf32>,
    } else {
    }
    %c0 = arith.constant 0 : index
    %c0_1 = arith.constant 0 : index
    %3 = vector.load %arg6[%c0, %c0_1] : memref<16x32xf32, #tpu.memory_space<vmem>>, vector<16x32xf32>
    %c0_2 = arith.constant 0 : index
    %c0_3 = arith.constant 0 : index
    %4 = vector.load %arg2[%c0_2, %c0_3] : memref<16x16xbf16, #tpu.memory_space<vmem>>, vector<16x16xbf16>
    %c0_4 = arith.constant 0 : index
    %c0_5 = arith.constant 0 : index
    %5 = vector.load %arg3[%c0_4, %c0_5] : memref<16x32xbf16, #tpu.memory_space<vmem>>, vector<16x32xbf16>
    %cst = arith.constant dense<0.000000e+00> : vector<16x32xf32>
    %6 = tpu.matmul %4, %5, %cst {dimension_numbers = #tpu.dot_dimension_numbers<[1], [0], [0], [1], [0, 0, 1, 1], [], []>} : vector<16x16xbf16>, vector<16x32xbf16>, vector<16x32xf32> -> vector<16x32xf32>
    %7 = arith.addf %3, %6 : vector<16x32xf32>
    %c0_6 = arith.constant 0 : index
    %c0_7 = arith.constant 0 : index
    %8 = vector.load %arg6[%c0_6, %c0_7] : memref<16x32xf32, #tpu.memory_space<vmem>>, vector<16x32xf32>
    tpu.vector_store %arg6[%c0_6, %c0_7], %7 {strides = array<i32>} : memref<16x32xf32, #tpu.memory_space<vmem>>, vector<16x32xf32>,
    %c0_i32_8 = arith.constant 0 : i32
    %9 = arith.cmpi eq, %arg1, %c0_i32_8 : i32
    %10 = arith.extui %9 : i1 to i32
    %c0_i32_9 = arith.constant 0 : i32
    %11 = arith.cmpi ne, %10, %c0_i32_9 : i32
    scf.if %11 {
      %c0_10 = arith.constant 0 : index
      %c0_11 = arith.constant 0 : index
      %12 = vector.load %arg6[%c0_10, %c0_11] : memref<16x32xf32, #tpu.memory_space<vmem>>, vector<16x32xf32>
      %c0_12 = arith.constant 0 : index
      %c0_13 = arith.constant 0 : index
      %13 = vector.load %arg4[%c0_12, %c0_13] : memref<1x32xf32, #tpu.memory_space<vmem>>, vector<1x32xf32>
      %14 = vector.broadcast %13 : vector<1x32xf32> to vector<16x32xf32>
      %15 = arith.addf %12, %14 : vector<16x32xf32>
      %16 = arith.truncf %15 : vector<16x32xf32> to vector<16x32xbf16>
      %c0_14 = arith.constant 0 : index
      %c0_15 = arith.constant 0 : index
      %17 = vector.load %arg5[%c0_14, %c0_15] : memref<16x32xbf16, #tpu.memory_space<vmem>>, vector<16x32xbf16>
      tpu.vector_store %arg5[%c0_14, %c0_15], %16 {strides = array<i32>} : memref<16x32xbf16, #tpu.memory_space<vmem>>, vector<16x32xbf16>,
    } else {
    }
    return
  }
  func.func @transform_0(%arg0: i32, %arg1: i32) -> (i32, i32) {
    %c0_i32 = arith.constant 0 : i32
    return %arg0, %arg1 : i32, i32
  }
  func.func @transform_1(%arg0: i32, %arg1: i32) -> (i32, i32) {
    %c0_i32 = arith.constant 0 : i32
    %c0_i32_0 = arith.constant 0 : i32
    return %arg1, %c0_i32 : i32, i32
  }
  func.func @transform_2(%arg0: i32, %arg1: i32) -> (i32, i32) {
    %c0_i32 = arith.constant 0 : i32
    %c0_i32_0 = arith.constant 0 : i32
    %c0_i32_1 = arith.constant 0 : i32
    return %c0_i32, %c0_i32_0 : i32, i32
  }
  func.func @transform_3(%arg0: i32, %arg1: i32) -> (i32, i32) {
    %c0_i32 = arith.constant 0 : i32
    %c0_i32_0 = arith.constant 0 : i32
    return %arg0, %c0_i32 : i32, i32
  }
}

module attributes {stable_mosaic.version = 11 : i64} {
  func.func @_ln_qkv_kernel(%arg0: i32, %arg1: memref<16x32xbf16, #tpu.memory_space<vmem>>, %arg2: memref<1x32xf32, #tpu.memory_space<vmem>>, %arg3: memref<1x32xf32, #tpu.memory_space<vmem>>, %arg4: memref<32x96xbf16, #tpu.memory_space<vmem>>, %arg5: memref<1x96xf32, #tpu.memory_space<vmem>>, %arg6: memref<16x32xbf16, #tpu.memory_space<vmem>>, %arg7: memref<16x32xbf16, #tpu.memory_space<vmem>>, %arg8: memref<16x32xbf16, #tpu.memory_space<vmem>>) attributes {dimension_semantics = [#tpu.dimension_semantics<parallel>], iteration_bounds = array<i64: 1>, scalar_prefetch = 0 : i64, scratch_operands = 0 : i64, tpu.core_type = #tpu.core_type<tc>, window_params = [{transform_indices = @transform_0, window_bounds = array<i64: 16, 32>}, {pipeline_mode = #tpu.pipeline_mode<synchronous>, transform_indices = @transform_1, window_bounds = array<i64: 1, 32>}, {pipeline_mode = #tpu.pipeline_mode<synchronous>, transform_indices = @transform_2, window_bounds = array<i64: 1, 32>}, {pipeline_mode = #tpu.pipeline_mode<synchronous>, transform_indices = @transform_3, window_bounds = array<i64: 32, 96>}, {pipeline_mode = #tpu.pipeline_mode<synchronous>, transform_indices = @transform_4, window_bounds = array<i64: 1, 96>}, {transform_indices = @transform_5, window_bounds = array<i64: 16, 32>}, {transform_indices = @transform_6, window_bounds = array<i64: 16, 32>}, {transform_indices = @transform_7, window_bounds = array<i64: 16, 32>}]} {
    %c0 = arith.constant 0 : index
    %c0_0 = arith.constant 0 : index
    %0 = vector.load %arg1[%c0, %c0_0] : memref<16x32xbf16, #tpu.memory_space<vmem>>, vector<16x32xbf16>
    %1 = arith.extf %0 : vector<16x32xbf16> to vector<16x32xf32>
    %cst = arith.constant dense<0.000000e+00> : vector<16xf32>
    %2 = vector.multi_reduction <add>, %1, %cst [1] : vector<16x32xf32> to vector<16xf32>
    %3 = vector.shape_cast %2 : vector<16xf32> to vector<16x1xf32>
    %cst_1 = arith.constant 3.200000e+01 : f32
    %4 = vector.broadcast %cst_1 : f32 to vector<16x1xf32>
    %5 = arith.divf %3, %4 : vector<16x1xf32>
    %6 = vector.broadcast %5 : vector<16x1xf32> to vector<16x32xf32>
    %7 = arith.subf %1, %6 : vector<16x32xf32>
    %8 = vector.broadcast %5 : vector<16x1xf32> to vector<16x32xf32>
    %9 = arith.subf %1, %8 : vector<16x32xf32>
    %10 = arith.mulf %7, %9 : vector<16x32xf32>
    %cst_2 = arith.constant dense<0.000000e+00> : vector<16xf32>
    %11 = vector.multi_reduction <add>, %10, %cst_2 [1] : vector<16x32xf32> to vector<16xf32>
    %12 = vector.shape_cast %11 : vector<16xf32> to vector<16x1xf32>
    %cst_3 = arith.constant 3.200000e+01 : f32
    %13 = vector.broadcast %cst_3 : f32 to vector<16x1xf32>
    %14 = arith.divf %12, %13 : vector<16x1xf32>
    %15 = vector.broadcast %5 : vector<16x1xf32> to vector<16x32xf32>
    %16 = arith.subf %1, %15 : vector<16x32xf32>
    %cst_4 = arith.constant 9.99999974E-6 : f32
    %17 = vector.broadcast %cst_4 : f32 to vector<16x1xf32>
    %18 = arith.addf %14, %17 : vector<16x1xf32>
    %19 = math.rsqrt %18 : vector<16x1xf32>
    %20 = vector.broadcast %19 : vector<16x1xf32> to vector<16x32xf32>
    %21 = arith.mulf %16, %20 : vector<16x32xf32>
    %c0_5 = arith.constant 0 : index
    %c0_6 = arith.constant 0 : index
    %22 = vector.load %arg2[%c0_5, %c0_6] : memref<1x32xf32, #tpu.memory_space<vmem>>, vector<1x32xf32>
    %23 = vector.broadcast %22 : vector<1x32xf32> to vector<16x32xf32>
    %24 = arith.mulf %21, %23 : vector<16x32xf32>
    %c0_7 = arith.constant 0 : index
    %c0_8 = arith.constant 0 : index
    %25 = vector.load %arg3[%c0_7, %c0_8] : memref<1x32xf32, #tpu.memory_space<vmem>>, vector<1x32xf32>
    %26 = vector.broadcast %25 : vector<1x32xf32> to vector<16x32xf32>
    %27 = arith.addf %24, %26 : vector<16x32xf32>
    %28 = arith.truncf %27 : vector<16x32xf32> to vector<16x32xbf16>
    %c0_9 = arith.constant 0 : index
    %c0_10 = arith.constant 0 : index
    %29 = vector.load %arg4[%c0_9, %c0_10] : memref<32x96xbf16, #tpu.memory_space<vmem>>, vector<32x96xbf16>
    %cst_11 = arith.constant dense<0.000000e+00> : vector<16x96xf32>
    %30 = tpu.matmul %28, %29, %cst_11 {dimension_numbers = #tpu.dot_dimension_numbers<[1], [0], [0], [1], [0, 0, 1, 1], [], []>} : vector<16x32xbf16>, vector<32x96xbf16>, vector<16x96xf32> -> vector<16x96xf32>
    %c0_12 = arith.constant 0 : index
    %c0_13 = arith.constant 0 : index
    %31 = vector.load %arg5[%c0_12, %c0_13] : memref<1x96xf32, #tpu.memory_space<vmem>>, vector<1x96xf32>
    %32 = vector.broadcast %31 : vector<1x96xf32> to vector<16x96xf32>
    %33 = arith.addf %30, %32 : vector<16x96xf32>
    %34 = arith.truncf %33 : vector<16x96xf32> to vector<16x96xbf16>
    %35 = vector.extract_strided_slice %34 {offsets = [0, 0], sizes = [16, 32], strides = [1, 1]} : vector<16x96xbf16> to vector<16x32xbf16>
    %c0_14 = arith.constant 0 : index
    %c0_15 = arith.constant 0 : index
    %36 = vector.load %arg6[%c0_14, %c0_15] : memref<16x32xbf16, #tpu.memory_space<vmem>>, vector<16x32xbf16>
    tpu.vector_store %arg6[%c0_14, %c0_15], %35 {strides = array<i32>} : memref<16x32xbf16, #tpu.memory_space<vmem>>, vector<16x32xbf16>,
    %37 = vector.extract_strided_slice %34 {offsets = [0, 32], sizes = [16, 32], strides = [1, 1]} : vector<16x96xbf16> to vector<16x32xbf16>
    %c0_16 = arith.constant 0 : index
    %c0_17 = arith.constant 0 : index
    %38 = vector.load %arg7[%c0_16, %c0_17] : memref<16x32xbf16, #tpu.memory_space<vmem>>, vector<16x32xbf16>
    tpu.vector_store %arg7[%c0_16, %c0_17], %37 {strides = array<i32>} : memref<16x32xbf16, #tpu.memory_space<vmem>>, vector<16x32xbf16>,
    %39 = vector.extract_strided_slice %34 {offsets = [0, 64], sizes = [16, 32], strides = [1, 1]} : vector<16x96xbf16> to vector<16x32xbf16>
    %c0_18 = arith.constant 0 : index
    %c0_19 = arith.constant 0 : index
    %40 = vector.load %arg8[%c0_18, %c0_19] : memref<16x32xbf16, #tpu.memory_space<vmem>>, vector<16x32xbf16>
    tpu.vector_store %arg8[%c0_18, %c0_19], %39 {strides = array<i32>} : memref<16x32xbf16, #tpu.memory_space<vmem>>, vector<16x32xbf16>,
    return
  }
  func.func @transform_0(%arg0: i32) -> (i32, i32) {
    %c0_i32 = arith.constant 0 : i32
    %c0_i32_0 = arith.constant 0 : i32
    return %arg0, %c0_i32 : i32, i32
  }
  func.func @transform_1(%arg0: i32) -> (i32, i32) {
    %c0_i32 = arith.constant 0 : i32
    %c0_i32_0 = arith.constant 0 : i32
    %c0_i32_1 = arith.constant 0 : i32
    return %c0_i32, %c0_i32_0 : i32, i32
  }
  func.func @transform_2(%arg0: i32) -> (i32, i32) {
    %c0_i32 = arith.constant 0 : i32
    %c0_i32_0 = arith.constant 0 : i32
    %c0_i32_1 = arith.constant 0 : i32
    return %c0_i32, %c0_i32_0 : i32, i32
  }
  func.func @transform_3(%arg0: i32) -> (i32, i32) {
    %c0_i32 = arith.constant 0 : i32
    %c0_i32_0 = arith.constant 0 : i32
    %c0_i32_1 = arith.constant 0 : i32
    return %c0_i32, %c0_i32_0 : i32, i32
  }
  func.func @transform_4(%arg0: i32) -> (i32, i32) {
    %c0_i32 = arith.constant 0 : i32
    %c0_i32_0 = arith.constant 0 : i32
    %c0_i32_1 = arith.constant 0 : i32
    return %c0_i32, %c0_i32_0 : i32, i32
  }
  func.func @transform_5(%arg0: i32) -> (i32, i32) {
    %c0_i32 = arith.constant 0 : i32
    %c0_i32_0 = arith.constant 0 : i32
    return %arg0, %c0_i32 : i32, i32
  }
  func.func @transform_6(%arg0: i32) -> (i32, i32) {
    %c0_i32 = arith.constant 0 : i32
    %c0_i32_0 = arith.constant 0 : i32
    return %arg0, %c0_i32 : i32, i32
  }
  func.func @transform_7(%arg0: i32) -> (i32, i32) {
    %c0_i32 = arith.constant 0 : i32
    %c0_i32_0 = arith.constant 0 : i32
    return %arg0, %c0_i32 : i32, i32
  }
}

module attributes {stable_mosaic.version = 11 : i64} {
  func.func @_flash_attn_kernel(%arg0: i32, %arg1: i32, %arg2: i32, %arg3: memref<1x8x32xbf16, #tpu.memory_space<vmem>>, %arg4: memref<1x8x32xbf16, #tpu.memory_space<vmem>>, %arg5: memref<1x8x32xbf16, #tpu.memory_space<vmem>>, %arg6: memref<1x8x32xbf16, #tpu.memory_space<vmem>>, %arg7: memref<8x4xf32, #tpu.memory_space<vmem>>, %arg8: memref<8x4xf32, #tpu.memory_space<vmem>>, %arg9: memref<8x32xf32, #tpu.memory_space<vmem>>) attributes {dimension_semantics = [#tpu.dimension_semantics<parallel>, #tpu.dimension_semantics<parallel>, #tpu.dimension_semantics<arbitrary>], iteration_bounds = array<i64: 2, 1, 1>, scalar_prefetch = 0 : i64, scratch_operands = 3 : i64, tpu.core_type = #tpu.core_type<tc>, window_params = [{transform_indices = @transform_0, window_bounds = array<i64: 1, 8, 32>}, {transform_indices = @transform_1, window_bounds = array<i64: 1, 8, 32>}, {transform_indices = @transform_2, window_bounds = array<i64: 1, 8, 32>}, {transform_indices = @transform_3, window_bounds = array<i64: 1, 8, 32>}]} {
    %c0_i32 = arith.constant 0 : i32
    %0 = arith.cmpi eq, %arg2, %c0_i32 : i32
    %1 = arith.extui %0 : i1 to i32
    %c0_i32_0 = arith.constant 0 : i32
    %2 = arith.cmpi ne, %1, %c0_i32_0 : i32
    scf.if %2 {
      %cst_68 = arith.constant 0xFF800000 : f32
      %120 = vector.broadcast %cst_68 : f32 to vector<8x4xf32>
      %c0_69 = arith.constant 0 : index
      %c0_70 = arith.constant 0 : index
      %121 = vector.load %arg7[%c0_69, %c0_70] : memref<8x4xf32, #tpu.memory_space<vmem>>, vector<8x4xf32>
      tpu.vector_store %arg7[%c0_69, %c0_70], %120 {strides = array<i32>} : memref<8x4xf32, #tpu.memory_space<vmem>>, vector<8x4xf32>,
      %cst_71 = arith.constant 0.000000e+00 : f32
      %122 = vector.broadcast %cst_71 : f32 to vector<8x4xf32>
      %c0_72 = arith.constant 0 : index
      %c0_73 = arith.constant 0 : index
      %123 = vector.load %arg8[%c0_72, %c0_73] : memref<8x4xf32, #tpu.memory_space<vmem>>, vector<8x4xf32>
      tpu.vector_store %arg8[%c0_72, %c0_73], %122 {strides = array<i32>} : memref<8x4xf32, #tpu.memory_space<vmem>>, vector<8x4xf32>,
      %cst_74 = arith.constant 0.000000e+00 : f32
      %124 = vector.broadcast %cst_74 : f32 to vector<8x32xf32>
      %c0_75 = arith.constant 0 : index
      %c0_76 = arith.constant 0 : index
      %125 = vector.load %arg9[%c0_75, %c0_76] : memref<8x32xf32, #tpu.memory_space<vmem>>, vector<8x32xf32>
      tpu.vector_store %arg9[%c0_75, %c0_76], %124 {strides = array<i32>} : memref<8x32xf32, #tpu.memory_space<vmem>>, vector<8x32xf32>,
    } else {
    }
    %c0 = arith.constant 0 : index
    %c0_1 = arith.constant 0 : index
    %c0_2 = arith.constant 0 : index
    %3 = vector.load %arg3[%c0, %c0_1, %c0_2] : memref<1x8x32xbf16, #tpu.memory_space<vmem>>, vector<1x8x32xbf16>
    %4 = vector.shape_cast %3 : vector<1x8x32xbf16> to vector<8x32xbf16>
    %c0_3 = arith.constant 0 : index
    %c0_4 = arith.constant 0 : index
    %c0_5 = arith.constant 0 : index
    %5 = vector.load %arg4[%c0_3, %c0_4, %c0_5] : memref<1x8x32xbf16, #tpu.memory_space<vmem>>, vector<1x8x32xbf16>
    %6 = vector.shape_cast %5 : vector<1x8x32xbf16> to vector<8x32xbf16>
    %c0_6 = arith.constant 0 : index
    %c0_7 = arith.constant 0 : index
    %c0_8 = arith.constant 0 : index
    %7 = vector.load %arg5[%c0_6, %c0_7, %c0_8] : memref<1x8x32xbf16, #tpu.memory_space<vmem>>, vector<1x8x32xbf16>
    %8 = vector.shape_cast %7 : vector<1x8x32xbf16> to vector<8x32xbf16>
    %9 = vector.extract_strided_slice %4 {offsets = [0, 0], sizes = [8, 8], strides = [1, 1]} : vector<8x32xbf16> to vector<8x8xbf16>
    %10 = vector.extract_strided_slice %6 {offsets = [0, 0], sizes = [8, 8], strides = [1, 1]} : vector<8x32xbf16> to vector<8x8xbf16>
    %11 = vector.extract_strided_slice %8 {offsets = [0, 0], sizes = [8, 8], strides = [1, 1]} : vector<8x32xbf16> to vector<8x8xbf16>
    %cst = arith.constant dense<0.000000e+00> : vector<8x8xf32>
    %12 = tpu.matmul %9, %10, %cst {dimension_numbers = #tpu.dot_dimension_numbers<[1], [1], [0], [0], [0, 0, 1, 0], [], []>} : vector<8x8xbf16>, vector<8x8xbf16>, vector<8x8xf32> -> vector<8x8xf32>
    %c0_9 = arith.constant 0 : index
    %c0_10 = arith.constant 0 : index
    %13 = vector.load %arg7[%c0_9, %c0_10] : memref<8x4xf32, #tpu.memory_space<vmem>>, vector<8x1xf32>
    %cst_11 = arith.constant dense<0xFF800000> : vector<8xf32>
    %14 = vector.multi_reduction <maximumf>, %12, %cst_11 [1] : vector<8x8xf32> to vector<8xf32>
    %15 = vector.shape_cast %14 : vector<8xf32> to vector<8x1xf32>
    %16 = arith.maximumf %13, %15 : vector<8x1xf32>
    %17 = arith.subf %13, %16 : vector<8x1xf32>
    %18 = math.exp %17 : vector<8x1xf32>
    %19 = vector.broadcast %16 : vector<8x1xf32> to vector<8x8xf32>
    %20 = arith.subf %12, %19 : vector<8x8xf32>
    %21 = math.exp %20 : vector<8x8xf32>
    %c0_12 = arith.constant 0 : index
    %c0_13 = arith.constant 0 : index
    %22 = vector.load %arg8[%c0_12, %c0_13] : memref<8x4xf32, #tpu.memory_space<vmem>>, vector<8x1xf32>
    %23 = arith.mulf %18, %22 : vector<8x1xf32>
    %cst_14 = arith.constant dense<0.000000e+00> : vector<8xf32>
    %24 = vector.multi_reduction <add>, %21, %cst_14 [1] : vector<8x8xf32> to vector<8xf32>
    %25 = vector.shape_cast %24 : vector<8xf32> to vector<8x1xf32>
    %26 = arith.addf %23, %25 : vector<8x1xf32>
    %c0_15 = arith.constant 0 : index
    %c0_16 = arith.constant 0 : index
    %27 = vector.load %arg8[%c0_15, %c0_16] : memref<8x4xf32, #tpu.memory_space<vmem>>, vector<8x1xf32>
    tpu.vector_store %arg8[%c0_15, %c0_16], %26 {strides = array<i32>} : memref<8x4xf32, #tpu.memory_space<vmem>>, vector<8x1xf32>,
    %c0_17 = arith.constant 0 : index
    %c0_18 = arith.constant 0 : index
    %28 = vector.load %arg9[%c0_17, %c0_18] : memref<8x32xf32, #tpu.memory_space<vmem>>, vector<8x8xf32>
    %29 = vector.broadcast %18 : vector<8x1xf32> to vector<8x8xf32>
    %30 = arith.mulf %29, %28 : vector<8x8xf32>
    %31 = arith.truncf %21 : vector<8x8xf32> to vector<8x8xbf16>
    %cst_19 = arith.constant dense<0.000000e+00> : vector<8x8xf32>
    %32 = tpu.matmul %31, %11, %cst_19 {dimension_numbers = #tpu.dot_dimension_numbers<[1], [0], [0], [1], [0, 0, 1, 1], [], []>} : vector<8x8xbf16>, vector<8x8xbf16>, vector<8x8xf32> -> vector<8x8xf32>
    %33 = arith.addf %30, %32 : vector<8x8xf32>
    %c0_20 = arith.constant 0 : index
    %c0_21 = arith.constant 0 : index
    %34 = vector.load %arg9[%c0_20, %c0_21] : memref<8x32xf32, #tpu.memory_space<vmem>>, vector<8x8xf32>
    tpu.vector_store %arg9[%c0_20, %c0_21], %33 {strides = array<i32>} : memref<8x32xf32, #tpu.memory_space<vmem>>, vector<8x8xf32>,
    %c0_22 = arith.constant 0 : index
    %c0_23 = arith.constant 0 : index
    %35 = vector.load %arg7[%c0_22, %c0_23] : memref<8x4xf32, #tpu.memory_space<vmem>>, vector<8x1xf32>
    tpu.vector_store %arg7[%c0_22, %c0_23], %16 {strides = array<i32>} : memref<8x4xf32, #tpu.memory_space<vmem>>, vector<8x1xf32>,
    %36 = vector.extract_strided_slice %4 {offsets = [0, 8], sizes = [8, 8], strides = [1, 1]} : vector<8x32xbf16> to vector<8x8xbf16>
    %37 = vector.extract_strided_slice %6 {offsets = [0, 8], sizes = [8, 8], strides = [1, 1]} : vector<8x32xbf16> to vector<8x8xbf16>
    %38 = vector.extract_strided_slice %8 {offsets = [0, 8], sizes = [8, 8], strides = [1, 1]} : vector<8x32xbf16> to vector<8x8xbf16>
    %cst_24 = arith.constant dense<0.000000e+00> : vector<8x8xf32>
    %39 = tpu.matmul %36, %37, %cst_24 {dimension_numbers = #tpu.dot_dimension_numbers<[1], [1], [0], [0], [0, 0, 1, 0], [], []>} : vector<8x8xbf16>, vector<8x8xbf16>, vector<8x8xf32> -> vector<8x8xf32>
    %c0_25 = arith.constant 0 : index
    %c1 = arith.constant 1 : index
    %40 = vector.load %arg7[%c0_25, %c1] : memref<8x4xf32, #tpu.memory_space<vmem>>, vector<8x1xf32>
    %cst_26 = arith.constant dense<0xFF800000> : vector<8xf32>
    %41 = vector.multi_reduction <maximumf>, %39, %cst_26 [1] : vector<8x8xf32> to vector<8xf32>
    %42 = vector.shape_cast %41 : vector<8xf32> to vector<8x1xf32>
    %43 = arith.maximumf %40, %42 : vector<8x1xf32>
    %44 = arith.subf %40, %43 : vector<8x1xf32>
    %45 = math.exp %44 : vector<8x1xf32>
    %46 = vector.broadcast %43 : vector<8x1xf32> to vector<8x8xf32>
    %47 = arith.subf %39, %46 : vector<8x8xf32>
    %48 = math.exp %47 : vector<8x8xf32>
    %c0_27 = arith.constant 0 : index
    %c1_28 = arith.constant 1 : index
    %49 = vector.load %arg8[%c0_27, %c1_28] : memref<8x4xf32, #tpu.memory_space<vmem>>, vector<8x1xf32>
    %50 = arith.mulf %45, %49 : vector<8x1xf32>
    %cst_29 = arith.constant dense<0.000000e+00> : vector<8xf32>
    %51 = vector.multi_reduction <add>, %48, %cst_29 [1] : vector<8x8xf32> to vector<8xf32>
    %52 = vector.shape_cast %51 : vector<8xf32> to vector<8x1xf32>
    %53 = arith.addf %50, %52 : vector<8x1xf32>
    %c0_30 = arith.constant 0 : index
    %c1_31 = arith.constant 1 : index
    %54 = vector.load %arg8[%c0_30, %c1_31] : memref<8x4xf32, #tpu.memory_space<vmem>>, vector<8x1xf32>
    tpu.vector_store %arg8[%c0_30, %c1_31], %53 {strides = array<i32>} : memref<8x4xf32, #tpu.memory_space<vmem>>, vector<8x1xf32>,
    %c0_32 = arith.constant 0 : index
    %c8 = arith.constant 8 : index
    %55 = vector.load %arg9[%c0_32, %c8] : memref<8x32xf32, #tpu.memory_space<vmem>>, vector<8x8xf32>
    %56 = vector.broadcast %45 : vector<8x1xf32> to vector<8x8xf32>
    %57 = arith.mulf %56, %55 : vector<8x8xf32>
    %58 = arith.truncf %48 : vector<8x8xf32> to vector<8x8xbf16>
    %cst_33 = arith.constant dense<0.000000e+00> : vector<8x8xf32>
    %59 = tpu.matmul %58, %38, %cst_33 {dimension_numbers = #tpu.dot_dimension_numbers<[1], [0], [0], [1], [0, 0, 1, 1], [], []>} : vector<8x8xbf16>, vector<8x8xbf16>, vector<8x8xf32> -> vector<8x8xf32>
    %60 = arith.addf %57, %59 : vector<8x8xf32>
    %c0_34 = arith.constant 0 : index
    %c8_35 = arith.constant 8 : index
    %61 = vector.load %arg9[%c0_34, %c8_35] : memref<8x32xf32, #tpu.memory_space<vmem>>, vector<8x8xf32>
    tpu.vector_store %arg9[%c0_34, %c8_35], %60 {strides = array<i32>} : memref<8x32xf32, #tpu.memory_space<vmem>>, vector<8x8xf32>,
    %c0_36 = arith.constant 0 : index
    %c1_37 = arith.constant 1 : index
    %62 = vector.load %arg7[%c0_36, %c1_37] : memref<8x4xf32, #tpu.memory_space<vmem>>, vector<8x1xf32>
    tpu.vector_store %arg7[%c0_36, %c1_37], %43 {strides = array<i32>} : memref<8x4xf32, #tpu.memory_space<vmem>>, vector<8x1xf32>,
    %63 = vector.extract_strided_slice %4 {offsets = [0, 16], sizes = [8, 8], strides = [1, 1]} : vector<8x32xbf16> to vector<8x8xbf16>
    %64 = vector.extract_strided_slice %6 {offsets = [0, 16], sizes = [8, 8], strides = [1, 1]} : vector<8x32xbf16> to vector<8x8xbf16>
    %65 = vector.extract_strided_slice %8 {offsets = [0, 16], sizes = [8, 8], strides = [1, 1]} : vector<8x32xbf16> to vector<8x8xbf16>
    %cst_38 = arith.constant dense<0.000000e+00> : vector<8x8xf32>
    %66 = tpu.matmul %63, %64, %cst_38 {dimension_numbers = #tpu.dot_dimension_numbers<[1], [1], [0], [0], [0, 0, 1, 0], [], []>} : vector<8x8xbf16>, vector<8x8xbf16>, vector<8x8xf32> -> vector<8x8xf32>
    %c0_39 = arith.constant 0 : index
    %c2 = arith.constant 2 : index
    %67 = vector.load %arg7[%c0_39, %c2] : memref<8x4xf32, #tpu.memory_space<vmem>>, vector<8x1xf32>
    %cst_40 = arith.constant dense<0xFF800000> : vector<8xf32>
    %68 = vector.multi_reduction <maximumf>, %66, %cst_40 [1] : vector<8x8xf32> to vector<8xf32>
    %69 = vector.shape_cast %68 : vector<8xf32> to vector<8x1xf32>
    %70 = arith.maximumf %67, %69 : vector<8x1xf32>
    %71 = arith.subf %67, %70 : vector<8x1xf32>
    %72 = math.exp %71 : vector<8x1xf32>
    %73 = vector.broadcast %70 : vector<8x1xf32> to vector<8x8xf32>
    %74 = arith.subf %66, %73 : vector<8x8xf32>
    %75 = math.exp %74 : vector<8x8xf32>
    %c0_41 = arith.constant 0 : index
    %c2_42 = arith.constant 2 : index
    %76 = vector.load %arg8[%c0_41, %c2_42] : memref<8x4xf32, #tpu.memory_space<vmem>>, vector<8x1xf32>
    %77 = arith.mulf %72, %76 : vector<8x1xf32>
    %cst_43 = arith.constant dense<0.000000e+00> : vector<8xf32>
    %78 = vector.multi_reduction <add>, %75, %cst_43 [1] : vector<8x8xf32> to vector<8xf32>
    %79 = vector.shape_cast %78 : vector<8xf32> to vector<8x1xf32>
    %80 = arith.addf %77, %79 : vector<8x1xf32>
    %c0_44 = arith.constant 0 : index
    %c2_45 = arith.constant 2 : index
    %81 = vector.load %arg8[%c0_44, %c2_45] : memref<8x4xf32, #tpu.memory_space<vmem>>, vector<8x1xf32>
    tpu.vector_store %arg8[%c0_44, %c2_45], %80 {strides = array<i32>} : memref<8x4xf32, #tpu.memory_space<vmem>>, vector<8x1xf32>,
    %c0_46 = arith.constant 0 : index
    %c16 = arith.constant 16 : index
    %82 = vector.load %arg9[%c0_46, %c16] : memref<8x32xf32, #tpu.memory_space<vmem>>, vector<8x8xf32>
    %83 = vector.broadcast %72 : vector<8x1xf32> to vector<8x8xf32>
    %84 = arith.mulf %83, %82 : vector<8x8xf32>
    %85 = arith.truncf %75 : vector<8x8xf32> to vector<8x8xbf16>
    %cst_47 = arith.constant dense<0.000000e+00> : vector<8x8xf32>
    %86 = tpu.matmul %85, %65, %cst_47 {dimension_numbers = #tpu.dot_dimension_numbers<[1], [0], [0], [1], [0, 0, 1, 1], [], []>} : vector<8x8xbf16>, vector<8x8xbf16>, vector<8x8xf32> -> vector<8x8xf32>
    %87 = arith.addf %84, %86 : vector<8x8xf32>
    %c0_48 = arith.constant 0 : index
    %c16_49 = arith.constant 16 : index
    %88 = vector.load %arg9[%c0_48, %c16_49] : memref<8x32xf32, #tpu.memory_space<vmem>>, vector<8x8xf32>
    tpu.vector_store %arg9[%c0_48, %c16_49], %87 {strides = array<i32>} : memref<8x32xf32, #tpu.memory_space<vmem>>, vector<8x8xf32>,
    %c0_50 = arith.constant 0 : index
    %c2_51 = arith.constant 2 : index
    %89 = vector.load %arg7[%c0_50, %c2_51] : memref<8x4xf32, #tpu.memory_space<vmem>>, vector<8x1xf32>
    tpu.vector_store %arg7[%c0_50, %c2_51], %70 {strides = array<i32>} : memref<8x4xf32, #tpu.memory_space<vmem>>, vector<8x1xf32>,
    %90 = vector.extract_strided_slice %4 {offsets = [0, 24], sizes = [8, 8], strides = [1, 1]} : vector<8x32xbf16> to vector<8x8xbf16>
    %91 = vector.extract_strided_slice %6 {offsets = [0, 24], sizes = [8, 8], strides = [1, 1]} : vector<8x32xbf16> to vector<8x8xbf16>
    %92 = vector.extract_strided_slice %8 {offsets = [0, 24], sizes = [8, 8], strides = [1, 1]} : vector<8x32xbf16> to vector<8x8xbf16>
    %cst_52 = arith.constant dense<0.000000e+00> : vector<8x8xf32>
    %93 = tpu.matmul %90, %91, %cst_52 {dimension_numbers = #tpu.dot_dimension_numbers<[1], [1], [0], [0], [0, 0, 1, 0], [], []>} : vector<8x8xbf16>, vector<8x8xbf16>, vector<8x8xf32> -> vector<8x8xf32>
    %c0_53 = arith.constant 0 : index
    %c3 = arith.constant 3 : index
    %94 = vector.load %arg7[%c0_53, %c3] : memref<8x4xf32, #tpu.memory_space<vmem>>, vector<8x1xf32>
    %cst_54 = arith.constant dense<0xFF800000> : vector<8xf32>
    %95 = vector.multi_reduction <maximumf>, %93, %cst_54 [1] : vector<8x8xf32> to vector<8xf32>
    %96 = vector.shape_cast %95 : vector<8xf32> to vector<8x1xf32>
    %97 = arith.maximumf %94, %96 : vector<8x1xf32>
    %98 = arith.subf %94, %97 : vector<8x1xf32>
    %99 = math.exp %98 : vector<8x1xf32>
    %100 = vector.broadcast %97 : vector<8x1xf32> to vector<8x8xf32>
    %101 = arith.subf %93, %100 : vector<8x8xf32>
    %102 = math.exp %101 : vector<8x8xf32>
    %c0_55 = arith.constant 0 : index
    %c3_56 = arith.constant 3 : index
    %103 = vector.load %arg8[%c0_55, %c3_56] : memref<8x4xf32, #tpu.memory_space<vmem>>, vector<8x1xf32>
    %104 = arith.mulf %99, %103 : vector<8x1xf32>
    %cst_57 = arith.constant dense<0.000000e+00> : vector<8xf32>
    %105 = vector.multi_reduction <add>, %102, %cst_57 [1] : vector<8x8xf32> to vector<8xf32>
    %106 = vector.shape_cast %105 : vector<8xf32> to vector<8x1xf32>
    %107 = arith.addf %104, %106 : vector<8x1xf32>
    %c0_58 = arith.constant 0 : index
    %c3_59 = arith.constant 3 : index
    %108 = vector.load %arg8[%c0_58, %c3_59] : memref<8x4xf32, #tpu.memory_space<vmem>>, vector<8x1xf32>
    tpu.vector_store %arg8[%c0_58, %c3_59], %107 {strides = array<i32>} : memref<8x4xf32, #tpu.memory_space<vmem>>, vector<8x1xf32>,
    %c0_60 = arith.constant 0 : index
    %c24 = arith.constant 24 : index
    %109 = vector.load %arg9[%c0_60, %c24] : memref<8x32xf32, #tpu.memory_space<vmem>>, vector<8x8xf32>
    %110 = vector.broadcast %99 : vector<8x1xf32> to vector<8x8xf32>
    %111 = arith.mulf %110, %109 : vector<8x8xf32>
    %112 = arith.truncf %102 : vector<8x8xf32> to vector<8x8xbf16>
    %cst_61 = arith.constant dense<0.000000e+00> : vector<8x8xf32>
    %113 = tpu.matmul %112, %92, %cst_61 {dimension_numbers = #tpu.dot_dimension_numbers<[1], [0], [0], [1], [0, 0, 1, 1], [], []>} : vector<8x8xbf16>, vector<8x8xbf16>, vector<8x8xf32> -> vector<8x8xf32>
    %114 = arith.addf %111, %113 : vector<8x8xf32>
    %c0_62 = arith.constant 0 : index
    %c24_63 = arith.constant 24 : index
    %115 = vector.load %arg9[%c0_62, %c24_63] : memref<8x32xf32, #tpu.memory_space<vmem>>, vector<8x8xf32>
    tpu.vector_store %arg9[%c0_62, %c24_63], %114 {strides = array<i32>} : memref<8x32xf32, #tpu.memory_space<vmem>>, vector<8x8xf32>,
    %c0_64 = arith.constant 0 : index
    %c3_65 = arith.constant 3 : index
    %116 = vector.load %arg7[%c0_64, %c3_65] : memref<8x4xf32, #tpu.memory_space<vmem>>, vector<8x1xf32>
    tpu.vector_store %arg7[%c0_64, %c3_65], %97 {strides = array<i32>} : memref<8x4xf32, #tpu.memory_space<vmem>>, vector<8x1xf32>,
    %c0_i32_66 = arith.constant 0 : i32
    %117 = arith.cmpi eq, %arg2, %c0_i32_66 : i32
    %118 = arith.extui %117 : i1 to i32
    %c0_i32_67 = arith.constant 0 : i32
    %119 = arith.cmpi ne, %118, %c0_i32_67 : i32
    scf.if %119 {
      %c0_68 = arith.constant 0 : index
      %c0_69 = arith.constant 0 : index
      %120 = vector.load %arg8[%c0_68, %c0_69] : memref<8x4xf32, #tpu.memory_space<vmem>>, vector<8x4xf32>
      %121 = tpu.reciprocal %120 {approx = true} : vector<8x4xf32> -> vector<8x4xf32>
      %c0_70 = arith.constant 0 : index
      %c0_71 = arith.constant 0 : index
      %122 = vector.load %arg9[%c0_70, %c0_71] : memref<8x32xf32, #tpu.memory_space<vmem>>, vector<8x8xf32>
      %123 = vector.extract_strided_slice %121 {offsets = [0, 0], sizes = [8, 1], strides = [1, 1]} : vector<8x4xf32> to vector<8x1xf32>
      %124 = vector.broadcast %123 : vector<8x1xf32> to vector<8x8xf32>
      %125 = arith.mulf %122, %124 : vector<8x8xf32>
      %c0_72 = arith.constant 0 : index
      %c8_73 = arith.constant 8 : index
      %126 = vector.load %arg9[%c0_72, %c8_73] : memref<8x32xf32, #tpu.memory_space<vmem>>, vector<8x8xf32>
      %127 = vector.extract_strided_slice %121 {offsets = [0, 1], sizes = [8, 1], strides = [1, 1]} : vector<8x4xf32> to vector<8x1xf32>
      %128 = vector.broadcast %127 : vector<8x1xf32> to vector<8x8xf32>
      %129 = arith.mulf %126, %128 : vector<8x8xf32>
      %c0_74 = arith.constant 0 : index
      %c16_75 = arith.constant 16 : index
      %130 = vector.load %arg9[%c0_74, %c16_75] : memref<8x32xf32, #tpu.memory_space<vmem>>, vector<8x8xf32>
      %131 = vector.extract_strided_slice %121 {offsets = [0, 2], sizes = [8, 1], strides = [1, 1]} : vector<8x4xf32> to vector<8x1xf32>
      %132 = vector.broadcast %131 : vector<8x1xf32> to vector<8x8xf32>
      %133 = arith.mulf %130, %132 : vector<8x8xf32>
      %c0_76 = arith.constant 0 : index
      %c24_77 = arith.constant 24 : index
      %134 = vector.load %arg9[%c0_76, %c24_77] : memref<8x32xf32, #tpu.memory_space<vmem>>, vector<8x8xf32>
      %135 = vector.extract_strided_slice %121 {offsets = [0, 3], sizes = [8, 1], strides = [1, 1]} : vector<8x4xf32> to vector<8x1xf32>
      %136 = vector.broadcast %135 : vector<8x1xf32> to vector<8x8xf32>
      %137 = arith.mulf %134, %136 : vector<8x8xf32>
      %138 = tpu.concatenate %125, %129, %133, %137 in 1 : vector<8x8xf32>, vector<8x8xf32>, vector<8x8xf32>, vector<8x8xf32> -> vector<8x32xf32>
      %139 = arith.truncf %138 : vector<8x32xf32> to vector<8x32xbf16>
      %c0_78 = arith.constant 0 : index
      %c0_79 = arith.constant 0 : index
      %c0_80 = arith.constant 0 : index
      %140 = vector.load %arg6[%c0_78, %c0_79, %c0_80] : memref<1x8x32xbf16, #tpu.memory_space<vmem>>, vector<1x8x32xbf16>
      %141 = vector.shape_cast %140 : vector<1x8x32xbf16> to vector<8x32xbf16>
      %142 = vector.shape_cast %139 : vector<8x32xbf16> to vector<1x8x32xbf16>
      tpu.vector_store %arg6[%c0_78, %c0_79, %c0_80], %142 {strides = array<i32>} : memref<1x8x32xbf16, #tpu.memory_space<vmem>>, vector<1x8x32xbf16>,
    } else {
    }
    return
  }
  func.func @transform_0(%arg0: i32, %arg1: i32, %arg2: i32) -> (i32, i32, i32) {
    %c0_i32 = arith.constant 0 : i32
    %c0_i32_0 = arith.constant 0 : i32
    return %arg0, %arg1, %c0_i32 : i32, i32, i32
  }
  func.func @transform_1(%arg0: i32, %arg1: i32, %arg2: i32) -> (i32, i32, i32) {
    %c0_i32 = arith.constant 0 : i32
    %c0_i32_0 = arith.constant 0 : i32
    return %arg0, %arg2, %c0_i32 : i32, i32, i32
  }
  func.func @transform_2(%arg0: i32, %arg1: i32, %arg2: i32) -> (i32, i32, i32) {
    %c0_i32 = arith.constant 0 : i32
    %c0_i32_0 = arith.constant 0 : i32
    return %arg0, %arg2, %c0_i32 : i32, i32, i32
  }
  func.func @transform_3(%arg0: i32, %arg1: i32, %arg2: i32) -> (i32, i32, i32) {
    %c0_i32 = arith.constant 0 : i32
    %c0_i32_0 = arith.constant 0 : i32
    return %arg0, %arg1, %c0_i32 : i32, i32, i32
  }
}

module attributes {stable_mosaic.version = 11 : i64} {
  func.func @_proj_residual_kernel(%arg0: i32, %arg1: memref<16x32xbf16, #tpu.memory_space<vmem>>, %arg2: memref<32x32xbf16, #tpu.memory_space<vmem>>, %arg3: memref<1x32xf32, #tpu.memory_space<vmem>>, %arg4: memref<16x32xbf16, #tpu.memory_space<vmem>>, %arg5: memref<16x32xbf16, #tpu.memory_space<vmem>>) attributes {dimension_semantics = [#tpu.dimension_semantics<parallel>], iteration_bounds = array<i64: 1>, scalar_prefetch = 0 : i64, scratch_operands = 0 : i64, tpu.core_type = #tpu.core_type<tc>, window_params = [{transform_indices = @transform_0, window_bounds = array<i64: 16, 32>}, {pipeline_mode = #tpu.pipeline_mode<synchronous>, transform_indices = @transform_1, window_bounds = array<i64: 32, 32>}, {pipeline_mode = #tpu.pipeline_mode<synchronous>, transform_indices = @transform_2, window_bounds = array<i64: 1, 32>}, {transform_indices = @transform_3, window_bounds = array<i64: 16, 32>}, {transform_indices = @transform_4, window_bounds = array<i64: 16, 32>}]} {
    %c0 = arith.constant 0 : index
    %c0_0 = arith.constant 0 : index
    %0 = vector.load %arg1[%c0, %c0_0] : memref<16x32xbf16, #tpu.memory_space<vmem>>, vector<16x32xbf16>
    %c0_1 = arith.constant 0 : index
    %c0_2 = arith.constant 0 : index
    %1 = vector.load %arg2[%c0_1, %c0_2] : memref<32x32xbf16, #tpu.memory_space<vmem>>, vector<32x32xbf16>
    %cst = arith.constant dense<0.000000e+00> : vector<16x32xf32>
    %2 = tpu.matmul %0, %1, %cst {dimension_numbers = #tpu.dot_dimension_numbers<[1], [0], [0], [1], [0, 0, 1, 1], [], []>} : vector<16x32xbf16>, vector<32x32xbf16>, vector<16x32xf32> -> vector<16x32xf32>
    %c0_3 = arith.constant 0 : index
    %c0_4 = arith.constant 0 : index
    %3 = vector.load %arg3[%c0_3, %c0_4] : memref<1x32xf32, #tpu.memory_space<vmem>>, vector<1x32xf32>
    %4 = vector.broadcast %3 : vector<1x32xf32> to vector<16x32xf32>
    %5 = arith.addf %2, %4 : vector<16x32xf32>
    %c0_5 = arith.constant 0 : index
    %c0_6 = arith.constant 0 : index
    %6 = vector.load %arg4[%c0_5, %c0_6] : memref<16x32xbf16, #tpu.memory_space<vmem>>, vector<16x32xbf16>
    %7 = arith.extf %6 : vector<16x32xbf16> to vector<16x32xf32>
    %8 = arith.addf %5, %7 : vector<16x32xf32>
    %9 = arith.truncf %8 : vector<16x32xf32> to vector<16x32xbf16>
    %c0_7 = arith.constant 0 : index
    %c0_8 = arith.constant 0 : index
    %10 = vector.load %arg5[%c0_7, %c0_8] : memref<16x32xbf16, #tpu.memory_space<vmem>>, vector<16x32xbf16>
    tpu.vector_store %arg5[%c0_7, %c0_8], %9 {strides = array<i32>} : memref<16x32xbf16, #tpu.memory_space<vmem>>, vector<16x32xbf16>,
    return
  }
  func.func @transform_0(%arg0: i32) -> (i32, i32) {
    %c0_i32 = arith.constant 0 : i32
    %c0_i32_0 = arith.constant 0 : i32
    return %arg0, %c0_i32 : i32, i32
  }
  func.func @transform_1(%arg0: i32) -> (i32, i32) {
    %c0_i32 = arith.constant 0 : i32
    %c0_i32_0 = arith.constant 0 : i32
    %c0_i32_1 = arith.constant 0 : i32
    return %c0_i32, %c0_i32_0 : i32, i32
  }
  func.func @transform_2(%arg0: i32) -> (i32, i32) {
    %c0_i32 = arith.constant 0 : i32
    %c0_i32_0 = arith.constant 0 : i32
    %c0_i32_1 = arith.constant 0 : i32
    return %c0_i32, %c0_i32_0 : i32, i32
  }
  func.func @transform_3(%arg0: i32) -> (i32, i32) {
    %c0_i32 = arith.constant 0 : i32
    %c0_i32_0 = arith.constant 0 : i32
    return %arg0, %c0_i32 : i32, i32
  }
  func.func @transform_4(%arg0: i32) -> (i32, i32) {
    %c0_i32 = arith.constant 0 : i32
    %c0_i32_0 = arith.constant 0 : i32
    return %arg0, %c0_i32 : i32, i32
  }
}

module attributes {stable_mosaic.version = 11 : i64} {
  func.func @_ln_ffn_residual_kernel(%arg0: i32, %arg1: memref<16x32xbf16, #tpu.memory_space<vmem>>, %arg2: memref<1x32xf32, #tpu.memory_space<vmem>>, %arg3: memref<1x32xf32, #tpu.memory_space<vmem>>, %arg4: memref<32x64xbf16, #tpu.memory_space<vmem>>, %arg5: memref<1x64xf32, #tpu.memory_space<vmem>>, %arg6: memref<64x32xbf16, #tpu.memory_space<vmem>>, %arg7: memref<1x32xf32, #tpu.memory_space<vmem>>, %arg8: memref<16x32xbf16, #tpu.memory_space<vmem>>) attributes {dimension_semantics = [#tpu.dimension_semantics<parallel>], iteration_bounds = array<i64: 1>, scalar_prefetch = 0 : i64, scratch_operands = 0 : i64, tpu.core_type = #tpu.core_type<tc>, window_params = [{transform_indices = @transform_0, window_bounds = array<i64: 16, 32>}, {pipeline_mode = #tpu.pipeline_mode<synchronous>, transform_indices = @transform_1, window_bounds = array<i64: 1, 32>}, {pipeline_mode = #tpu.pipeline_mode<synchronous>, transform_indices = @transform_2, window_bounds = array<i64: 1, 32>}, {pipeline_mode = #tpu.pipeline_mode<synchronous>, transform_indices = @transform_3, window_bounds = array<i64: 32, 64>}, {pipeline_mode = #tpu.pipeline_mode<synchronous>, transform_indices = @transform_4, window_bounds = array<i64: 1, 64>}, {pipeline_mode = #tpu.pipeline_mode<synchronous>, transform_indices = @transform_5, window_bounds = array<i64: 64, 32>}, {pipeline_mode = #tpu.pipeline_mode<synchronous>, transform_indices = @transform_6, window_bounds = array<i64: 1, 32>}, {transform_indices = @transform_7, window_bounds = array<i64: 16, 32>}]} {
    %c0 = arith.constant 0 : index
    %c0_0 = arith.constant 0 : index
    %0 = vector.load %arg1[%c0, %c0_0] : memref<16x32xbf16, #tpu.memory_space<vmem>>, vector<16x32xbf16>
    %1 = arith.extf %0 : vector<16x32xbf16> to vector<16x32xf32>
    %cst = arith.constant dense<0.000000e+00> : vector<16xf32>
    %2 = vector.multi_reduction <add>, %1, %cst [1] : vector<16x32xf32> to vector<16xf32>
    %3 = vector.shape_cast %2 : vector<16xf32> to vector<16x1xf32>
    %cst_1 = arith.constant 3.200000e+01 : f32
    %4 = vector.broadcast %cst_1 : f32 to vector<16x1xf32>
    %5 = arith.divf %3, %4 : vector<16x1xf32>
    %6 = vector.broadcast %5 : vector<16x1xf32> to vector<16x32xf32>
    %7 = arith.subf %1, %6 : vector<16x32xf32>
    %8 = vector.broadcast %5 : vector<16x1xf32> to vector<16x32xf32>
    %9 = arith.subf %1, %8 : vector<16x32xf32>
    %10 = arith.mulf %7, %9 : vector<16x32xf32>
    %cst_2 = arith.constant dense<0.000000e+00> : vector<16xf32>
    %11 = vector.multi_reduction <add>, %10, %cst_2 [1] : vector<16x32xf32> to vector<16xf32>
    %12 = vector.shape_cast %11 : vector<16xf32> to vector<16x1xf32>
    %cst_3 = arith.constant 3.200000e+01 : f32
    %13 = vector.broadcast %cst_3 : f32 to vector<16x1xf32>
    %14 = arith.divf %12, %13 : vector<16x1xf32>
    %15 = vector.broadcast %5 : vector<16x1xf32> to vector<16x32xf32>
    %16 = arith.subf %1, %15 : vector<16x32xf32>
    %cst_4 = arith.constant 9.99999974E-6 : f32
    %17 = vector.broadcast %cst_4 : f32 to vector<16x1xf32>
    %18 = arith.addf %14, %17 : vector<16x1xf32>
    %19 = math.rsqrt %18 : vector<16x1xf32>
    %20 = vector.broadcast %19 : vector<16x1xf32> to vector<16x32xf32>
    %21 = arith.mulf %16, %20 : vector<16x32xf32>
    %c0_5 = arith.constant 0 : index
    %c0_6 = arith.constant 0 : index
    %22 = vector.load %arg2[%c0_5, %c0_6] : memref<1x32xf32, #tpu.memory_space<vmem>>, vector<1x32xf32>
    %23 = vector.broadcast %22 : vector<1x32xf32> to vector<16x32xf32>
    %24 = arith.mulf %21, %23 : vector<16x32xf32>
    %c0_7 = arith.constant 0 : index
    %c0_8 = arith.constant 0 : index
    %25 = vector.load %arg3[%c0_7, %c0_8] : memref<1x32xf32, #tpu.memory_space<vmem>>, vector<1x32xf32>
    %26 = vector.broadcast %25 : vector<1x32xf32> to vector<16x32xf32>
    %27 = arith.addf %24, %26 : vector<16x32xf32>
    %28 = arith.truncf %27 : vector<16x32xf32> to vector<16x32xbf16>
    %c0_9 = arith.constant 0 : index
    %c0_10 = arith.constant 0 : index
    %29 = vector.load %arg4[%c0_9, %c0_10] : memref<32x64xbf16, #tpu.memory_space<vmem>>, vector<32x64xbf16>
    %cst_11 = arith.constant dense<0.000000e+00> : vector<16x64xf32>
    %30 = tpu.matmul %28, %29, %cst_11 {dimension_numbers = #tpu.dot_dimension_numbers<[1], [0], [0], [1], [0, 0, 1, 1], [], []>} : vector<16x32xbf16>, vector<32x64xbf16>, vector<16x64xf32> -> vector<16x64xf32>
    %c0_12 = arith.constant 0 : index
    %c0_13 = arith.constant 0 : index
    %31 = vector.load %arg5[%c0_12, %c0_13] : memref<1x64xf32, #tpu.memory_space<vmem>>, vector<1x64xf32>
    %32 = vector.broadcast %31 : vector<1x64xf32> to vector<16x64xf32>
    %33 = arith.addf %30, %32 : vector<16x64xf32>
    %34 = arith.mulf %33, %33 : vector<16x64xf32>
    %35 = arith.mulf %33, %34 : vector<16x64xf32>
    %cst_14 = arith.constant 4.471500e-02 : f32
    %36 = vector.broadcast %cst_14 : f32 to vector<16x64xf32>
    %37 = arith.mulf %36, %35 : vector<16x64xf32>
    %38 = arith.addf %33, %37 : vector<16x64xf32>
    %cst_15 = arith.constant 0.797884583 : f32
    %39 = vector.broadcast %cst_15 : f32 to vector<16x64xf32>
    %40 = arith.mulf %39, %38 : vector<16x64xf32>
    %41 = math.tanh %40 : vector<16x64xf32>
    %cst_16 = arith.constant 1.000000e+00 : f32
    %42 = vector.broadcast %cst_16 : f32 to vector<16x64xf32>
    %43 = arith.addf %42, %41 : vector<16x64xf32>
    %cst_17 = arith.constant 5.000000e-01 : f32
    %44 = vector.broadcast %cst_17 : f32 to vector<16x64xf32>
    %45 = arith.mulf %44, %43 : vector<16x64xf32>
    %46 = arith.mulf %33, %45 : vector<16x64xf32>
    %47 = arith.truncf %46 : vector<16x64xf32> to vector<16x64xbf16>
    %c0_18 = arith.constant 0 : index
    %c0_19 = arith.constant 0 : index
    %48 = vector.load %arg6[%c0_18, %c0_19] : memref<64x32xbf16, #tpu.memory_space<vmem>>, vector<64x32xbf16>
    %cst_20 = arith.constant dense<0.000000e+00> : vector<16x32xf32>
    %49 = tpu.matmul %47, %48, %cst_20 {dimension_numbers = #tpu.dot_dimension_numbers<[1], [0], [0], [1], [0, 0, 1, 1], [], []>} : vector<16x64xbf16>, vector<64x32xbf16>, vector<16x32xf32> -> vector<16x32xf32>
    %c0_21 = arith.constant 0 : index
    %c0_22 = arith.constant 0 : index
    %50 = vector.load %arg7[%c0_21, %c0_22] : memref<1x32xf32, #tpu.memory_space<vmem>>, vector<1x32xf32>
    %51 = vector.broadcast %50 : vector<1x32xf32> to vector<16x32xf32>
    %52 = arith.addf %49, %51 : vector<16x32xf32>
    %53 = arith.addf %52, %1 : vector<16x32xf32>
    %54 = arith.truncf %53 : vector<16x32xf32> to vector<16x32xbf16>
    %c0_23 = arith.constant 0 : index
    %c0_24 = arith.constant 0 : index
    %55 = vector.load %arg8[%c0_23, %c0_24] : memref<16x32xbf16, #tpu.memory_space<vmem>>, vector<16x32xbf16>
    tpu.vector_store %arg8[%c0_23, %c0_24], %54 {strides = array<i32>} : memref<16x32xbf16, #tpu.memory_space<vmem>>, vector<16x32xbf16>,
    return
  }
  func.func @transform_0(%arg0: i32) -> (i32, i32) {
    %c0_i32 = arith.constant 0 : i32
    %c0_i32_0 = arith.constant 0 : i32
    return %arg0, %c0_i32 : i32, i32
  }
  func.func @transform_1(%arg0: i32) -> (i32, i32) {
    %c0_i32 = arith.constant 0 : i32
    %c0_i32_0 = arith.constant 0 : i32
    %c0_i32_1 = arith.constant 0 : i32
    return %c0_i32, %c0_i32_0 : i32, i32
  }
  func.func @transform_2(%arg0: i32) -> (i32, i32) {
    %c0_i32 = arith.constant 0 : i32
    %c0_i32_0 = arith.constant 0 : i32
    %c0_i32_1 = arith.constant 0 : i32
    return %c0_i32, %c0_i32_0 : i32, i32
  }
  func.func @transform_3(%arg0: i32) -> (i32, i32) {
    %c0_i32 = arith.constant 0 : i32
    %c0_i32_0 = arith.constant 0 : i32
    %c0_i32_1 = arith.constant 0 : i32
    return %c0_i32, %c0_i32_0 : i32, i32
  }
  func.func @transform_4(%arg0: i32) -> (i32, i32) {
    %c0_i32 = arith.constant 0 : i32
    %c0_i32_0 = arith.constant 0 : i32
    %c0_i32_1 = arith.constant 0 : i32
    return %c0_i32, %c0_i32_0 : i32, i32
  }
  func.func @transform_5(%arg0: i32) -> (i32, i32) {
    %c0_i32 = arith.constant 0 : i32
    %c0_i32_0 = arith.constant 0 : i32
    %c0_i32_1 = arith.constant 0 : i32
    return %c0_i32, %c0_i32_0 : i32, i32
  }
  func.func @transform_6(%arg0: i32) -> (i32, i32) {
    %c0_i32 = arith.constant 0 : i32
    %c0_i32_0 = arith.constant 0 : i32
    %c0_i32_1 = arith.constant 0 : i32
    return %c0_i32, %c0_i32_0 : i32, i32
  }
  func.func @transform_7(%arg0: i32) -> (i32, i32) {
    %c0_i32 = arith.constant 0 : i32
    %c0_i32_0 = arith.constant 0 : i32
    return %arg0, %c0_i32 : i32, i32
  }
}

module attributes {stable_mosaic.version = 11 : i64} {
  func.func @_linear_kernel(%arg0: i32, %arg1: i32, %arg2: memref<16x32xbf16, #tpu.memory_space<vmem>>, %arg3: memref<32x8xbf16, #tpu.memory_space<vmem>>, %arg4: memref<1x8xf32, #tpu.memory_space<vmem>>, %arg5: memref<16x8xbf16, #tpu.memory_space<vmem>>, %arg6: memref<16x8xf32, #tpu.memory_space<vmem>>) attributes {dimension_semantics = [#tpu.dimension_semantics<parallel>, #tpu.dimension_semantics<arbitrary>], iteration_bounds = array<i64: 1, 1>, scalar_prefetch = 0 : i64, scratch_operands = 1 : i64, tpu.core_type = #tpu.core_type<tc>, window_params = [{transform_indices = @transform_0, window_bounds = array<i64: 16, 32>}, {transform_indices = @transform_1, window_bounds = array<i64: 32, 8>}, {pipeline_mode = #tpu.pipeline_mode<synchronous>, transform_indices = @transform_2, window_bounds = array<i64: 1, 8>}, {transform_indices = @transform_3, window_bounds = array<i64: 16, 8>}]} {
    %c0_i32 = arith.constant 0 : i32
    %0 = arith.cmpi eq, %arg1, %c0_i32 : i32
    %1 = arith.extui %0 : i1 to i32
    %c0_i32_0 = arith.constant 0 : i32
    %2 = arith.cmpi ne, %1, %c0_i32_0 : i32
    scf.if %2 {
      %cst_10 = arith.constant 0.000000e+00 : f32
      %12 = vector.broadcast %cst_10 : f32 to vector<16x8xf32>
      %c0_11 = arith.constant 0 : index
      %c0_12 = arith.constant 0 : index
      %13 = vector.load %arg6[%c0_11, %c0_12] : memref<16x8xf32, #tpu.memory_space<vmem>>, vector<16x8xf32>
      tpu.vector_store %arg6[%c0_11, %c0_12], %12 {strides = array<i32>} : memref<16x8xf32, #tpu.memory_space<vmem>>, vector<16x8xf32>,
    } else {
    }
    %c0 = arith.constant 0 : index
    %c0_1 = arith.constant 0 : index
    %3 = vector.load %arg6[%c0, %c0_1] : memref<16x8xf32, #tpu.memory_space<vmem>>, vector<16x8xf32>
    %c0_2 = arith.constant 0 : index
    %c0_3 = arith.constant 0 : index
    %4 = vector.load %arg2[%c0_2, %c0_3] : memref<16x32xbf16, #tpu.memory_space<vmem>>, vector<16x32xbf16>
    %c0_4 = arith.constant 0 : index
    %c0_5 = arith.constant 0 : index
    %5 = vector.load %arg3[%c0_4, %c0_5] : memref<32x8xbf16, #tpu.memory_space<vmem>>, vector<32x8xbf16>
    %cst = arith.constant dense<0.000000e+00> : vector<16x8xf32>
    %6 = tpu.matmul %4, %5, %cst {dimension_numbers = #tpu.dot_dimension_numbers<[1], [0], [0], [1], [0, 0, 1, 1], [], []>} : vector<16x32xbf16>, vector<32x8xbf16>, vector<16x8xf32> -> vector<16x8xf32>
    %7 = arith.addf %3, %6 : vector<16x8xf32>
    %c0_6 = arith.constant 0 : index
    %c0_7 = arith.constant 0 : index
    %8 = vector.load %arg6[%c0_6, %c0_7] : memref<16x8xf32, #tpu.memory_space<vmem>>, vector<16x8xf32>
    tpu.vector_store %arg6[%c0_6, %c0_7], %7 {strides = array<i32>} : memref<16x8xf32, #tpu.memory_space<vmem>>, vector<16x8xf32>,
    %c0_i32_8 = arith.constant 0 : i32
    %9 = arith.cmpi eq, %arg1, %c0_i32_8 : i32
    %10 = arith.extui %9 : i1 to i32
    %c0_i32_9 = arith.constant 0 : i32
    %11 = arith.cmpi ne, %10, %c0_i32_9 : i32
    scf.if %11 {
      %c0_10 = arith.constant 0 : index
      %c0_11 = arith.constant 0 : index
      %12 = vector.load %arg6[%c0_10, %c0_11] : memref<16x8xf32, #tpu.memory_space<vmem>>, vector<16x8xf32>
      %c0_12 = arith.constant 0 : index
      %c0_13 = arith.constant 0 : index
      %13 = vector.load %arg4[%c0_12, %c0_13] : memref<1x8xf32, #tpu.memory_space<vmem>>, vector<1x8xf32>
      %14 = vector.broadcast %13 : vector<1x8xf32> to vector<16x8xf32>
      %15 = arith.addf %12, %14 : vector<16x8xf32>
      %16 = arith.truncf %15 : vector<16x8xf32> to vector<16x8xbf16>
      %c0_14 = arith.constant 0 : index
      %c0_15 = arith.constant 0 : index
      %17 = vector.load %arg5[%c0_14, %c0_15] : memref<16x8xbf16, #tpu.memory_space<vmem>>, vector<16x8xbf16>
      tpu.vector_store %arg5[%c0_14, %c0_15], %16 {strides = array<i32>} : memref<16x8xbf16, #tpu.memory_space<vmem>>, vector<16x8xbf16>,
    } else {
    }
    return
  }
  func.func @transform_0(%arg0: i32, %arg1: i32) -> (i32, i32) {
    %c0_i32 = arith.constant 0 : i32
    return %arg0, %arg1 : i32, i32
  }
  func.func @transform_1(%arg0: i32, %arg1: i32) -> (i32, i32) {
    %c0_i32 = arith.constant 0 : i32
    %c0_i32_0 = arith.constant 0 : i32
    return %arg1, %c0_i32 : i32, i32
  }
  func.func @transform_2(%arg0: i32, %arg1: i32) -> (i32, i32) {
    %c0_i32 = arith.constant 0 : i32
    %c0_i32_0 = arith.constant 0 : i32
    %c0_i32_1 = arith.constant 0 : i32
    return %c0_i32, %c0_i32_0 : i32, i32
  }
  func.func @transform_3(%arg0: i32, %arg1: i32) -> (i32, i32) {
    %c0_i32 = arith.constant 0 : i32
    %c0_i32_0 = arith.constant 0 : i32
    return %arg0, %c0_i32 : i32, i32
  }
}

</mosaic_0001>

<llo_original>
// kernel: mixecn_forward.11
$region0: #{mixecn_forward.11}
  #allocation0 [shape = 'u32[]', space=smem, size = 0x4, offset = 0x4, fixed_abs, tag = 'smem constant byte address 0x4 - core index']
  #allocation1 [shape = 'u32[144,128]{1,0:T(1,128)}', space=vmem, size = 0x12000, scoped, tag = 'internal scratch']
  %s0 = inlined_call_operand.vmem [shape: bf16[16,32], index: 0, kind: input, shape index: {}]
  %s1 = inlined_call_operand.vmem [shape: f32[1,32], index: 1, kind: input, shape index: {}]
  %s2 = inlined_call_operand.vmem [shape: f32[1,32], index: 2, kind: input, shape index: {}]
  %s3 = inlined_call_operand.vmem [shape: bf16[32,96], index: 3, kind: input, shape index: {}]
  %s4 = inlined_call_operand.vmem [shape: f32[1,96], index: 4, kind: input, shape index: {}]
  %s5 = inlined_call_operand.vmem [shape: bf16[16,32], index: 5, kind: output, shape index: {0}]
  %s6 = inlined_call_operand.vmem [shape: bf16[16,32], index: 6, kind: output, shape index: {1}]
  %s7 = inlined_call_operand.vmem [shape: bf16[16,32], index: 7, kind: output, shape index: {2}]
  %8 = xla_tuple %s5, %s6, %s7
  %s9 = sld [smem:[#allocation0]]
  $region46: #{mixecn_forward.11} parent=0
    _
  %s11 = ssub.s32 1, %s9
  %s12 = scalar_select 0, %s11, %s9
  // Predicated region
  $region2: #{mixecn_forward.11} parent=0 // pred_check
    _
  $region3: #{mixecn_forward.11} parent=0 // pred_check_branch
    %14 = sbr.rel (0) target = $region5
  $region4: #{mixecn_forward.11} parent=0 // pred_region
    _
  $region5: #{mixecn_forward.11} parent=0 // pred_fallthru
    _
  // Predicated region
  $region6: #{mixecn_forward.11} parent=0 // pred_check
    _
  $region7: #{mixecn_forward.11} parent=0 // pred_check_branch
    %16 = sbr.rel (0) target = $region9
  $region8: #{mixecn_forward.11} parent=0 // pred_region
    _
  $region9: #{mixecn_forward.11} parent=0 // pred_fallthru
    _
  // Predicated region
  $region10: #{mixecn_forward.11} parent=0 // pred_check
    _
  $region11: #{mixecn_forward.11} parent=0 // pred_check_branch
    %18 = sbr.rel (0) target = $region13
  $region12: #{mixecn_forward.11} parent=0 // pred_region
    _
  $region13: #{mixecn_forward.11} parent=0 // pred_fallthru
    _
  // Predicated region
  $region14: #{mixecn_forward.11} parent=0 // pred_check
    _
  $region15: #{mixecn_forward.11} parent=0 // pred_check_branch
    %20 = sbr.rel (0) target = $region17
  $region16: #{mixecn_forward.11} parent=0 // pred_region
    _
  $region17: #{mixecn_forward.11} parent=0 // pred_fallthru
    _
  // Predicated region
  $region18: #{mixecn_forward.11} parent=0 // pred_check
    _
  $region19: #{mixecn_forward.11} parent=0 // pred_check_branch
    %22 = sbr.rel (0) target = $region21
  $region20: #{mixecn_forward.11} parent=0 // pred_region
    _
  $region21: #{mixecn_forward.11} parent=0 // pred_fallthru
    _
  %v24 = vld [vmem:[%s0] sm:$0xf]
  %v25 = vld [vmem:[%s0 + $0x4] sm:$0xf]
  %v26 = vunpack.c.l.bf16 %v24
  %v27 = vunpack.c.l.bf16 %v25
  %vm28 = vcmask 261120
  %v29 = vsel %vm28, %v26, 0.0
  %30 = vadd.xlane.f32.xlu0 %v29
  %v31 = vpop.xlane.xlu0 %30
  %v32 = vsel %vm28, %v27, 0.0
  %33 = vadd.xlane.f32.xlu0 %v32
  %v34 = vpop.xlane.xlu0 %33
  %v35 = vrcp.pop 32.0
  %v36 = vmul.f32 %v31, %v35
  %v37 = vmul.f32 %v34, %v35
  %v38 = vsub.f32 %v26, %v36
  %v39 = vsub.f32 %v27, %v37
  %v40 = vmul.f32 %v38, %v38
  %v41 = vmul.f32 %v39, %v39
  %v42 = vsel %vm28, %v40, 0.0
  %43 = vadd.xlane.f32.xlu0 %v42
  %v44 = vpop.xlane.xlu0 %43
  %v45 = vsel %vm28, %v41, 0.0
  %46 = vadd.xlane.f32.xlu0 %v45
  %v47 = vpop.xlane.xlu0 %46
  %v48 = vmul.f32 %v44, %v35
  %v49 = vmul.f32 %v47, %v35
  %v50 = vadd.f32 %v48, 1e-05
  %v51 = vadd.f32 %v49, 1e-05
  %v52 = vrsqrt.pop %v50
  %v53 = vrsqrt.pop %v51
  %v54 = vmul.f32 %v38, %v52
  %v55 = vmul.f32 %v39, %v53
  %v56 = vld [vmem:[%s1] sm:$0x1]
  %v58 = vlaneseq
  %v59 = vshrl.u32 %v58, 7
  %v60 = vsub.s32 0, %v59
  %v61 = vrot.slane %v56, %v60
  %v63 = vmul.f32 %v54, %v61
  %v64 = vmul.f32 %v55, %v61
  %v65 = vld [vmem:[%s2] sm:$0x1]
  %v67 = vlaneseq
  %v68 = vshrl.u32 %v67, 7
  %v69 = vsub.s32 0, %v68
  %v70 = vrot.slane %v65, %v69
  %v72 = vadd.f32 %v63, %v70
  %v73 = vadd.f32 %v64, %v70
  %v74 = vpack.c.bf16 %v73, %v72
  %v75 = vld [vmem:[%s3] sm:$0xf]
  %v76 = vld [vmem:[%s3 + $0x4] sm:$0xf]
  %v77 = vld [vmem:[%s3 + $0x8] sm:$0xf]
  %v78 = vld [vmem:[%s3 + $0xc] sm:$0xf]
  %v79 = vld [vmem:[%s4] sm:$0x1]
  %v81 = vlaneseq
  %v82 = vshrl.u32 %v81, 7
  %v83 = vsub.s32 0, %v82
  %v84 = vrot.slane %v79, %v83
  %v90 = vunpack.c.l.b16 %v75
  %v91 = vunpack.c.l.b16 %v76
  %v92 = vunpack.c.l.b16 %v77
  %v93 = vunpack.c.l.b16 %v78
  %v94 = vpack.c.b16 %v91, %v90
  %v95 = vpack.c.b16 %v93, %v92
  %v99 = vsel %vm28, %v74, 0
  %101 = vmatprep.subr.bf16.mxu0 0
  %102 = vmatpush1.bf16.msra.mxu0 %v94
  %103 = vmatprep.subr.bf16.mxu0 0
  %104 = vmatpush1.bf16.msra.mxu0 %v95
  %105 = vmatprep.subr.bf16.mxu0 0
  %106 = vmatpush1.bf16.msra.mxu0 0
  %107 = vmatprep.subr.bf16.mxu0 0
  %108 = vmatpush1.bf16.msra.mxu0 0
  %109 = vmatprep.subr.bf16.mxu0 0
  %110 = vmatpush1.bf16.msra.mxu0 0
  %111 = vmatprep.subr.bf16.mxu0 0
  %112 = vmatpush1.bf16.msra.mxu0 0
  %113 = vmatprep.subr.bf16.mxu0 0
  %114 = vmatpush1.bf16.msra.mxu0 0
  %115 = vmatprep.subr.bf16.mxu0 0
  %116 = vmatpush1.bf16.msra.mxu0 0
  %117 = vmatprep.subr.bf16.mxu0 0
  %118 = vmatpush1.bf16.msra.mxu0 0
  %119 = vmatprep.subr.bf16.mxu0 0
  %120 = vmatpush1.bf16.msra.mxu0 0
  %121 = vmatprep.subr.bf16.mxu0 0
  %122 = vmatpush1.bf16.msra.mxu0 0
  %123 = vmatprep.subr.bf16.mxu0 0
  %124 = vmatpush1.bf16.msra.mxu0 0
  %125 = vmatprep.subr.bf16.mxu0 0
  %126 = vmatpush1.bf16.msra.mxu0 0
  %127 = vmatprep.subr.bf16.mxu0 0
  %128 = vmatpush1.bf16.msra.mxu0 0
  %129 = vmatprep.subr.bf16.mxu0 0
  %130 = vmatpush1.bf16.msra.mxu0 0
  %131 = vmatprep.subr.bf16.mxu0 0
  %132 = vmatpush1.bf16.msra.mxu0 0
  %133 = vmatprep.mubr.bf16.mxu0 0
  %134 = vmatmul.mubr.bf16.gmra.mrb[0].mxu0 %v99
  %v135 = vpop.f32.mrb[0].mxu0
  %v136 = vadd.f32 %v84, %v135
  %v137 = vpop.f32.mrb[0].mxu0
  %v138 = vpop.f32.mrb[0].mxu0
  %v139 = vadd.f32 %v84, %v138
  %v140 = vpop.f32.mrb[0].mxu0
  %141 = vdwg.mxu0
  %v142 = vpack.c.bf16 %v139, %v136
  %v144 = vunpack.c.l.b16 %v142
  %v145 = vunpack.c.h.b16 %v142
  %v146 = vpack.c.b16 %v144, %v144
  %v147 = vpack.c.b16 %v145, %v145
  %vm150 = vcmask 257024
  %151 = vst.msk [vmem:[%s5] sm:$0xf] %vm150, %v146
  %152 = vst.msk [vmem:[%s5 + $0x4] sm:$0xf] %vm150, %v147
  %153 = vrot.lane.b32.xlu0 %v146, 96
  %v154 = vpop.permute.xlu0 %153
  %155 = vrot.lane.b32.xlu0 %v147, 96
  %v156 = vpop.permute.xlu0 %155
  %159 = vst.msk [vmem:[%s6] sm:$0xf] %vm150, %v154
  %160 = vst.msk [vmem:[%s6 + $0x4] sm:$0xf] %vm150, %v156
  %161 = vrot.lane.b32.xlu0 %v146, 64
  %v162 = vpop.permute.xlu0 %161
  %163 = vrot.lane.b32.xlu0 %v147, 64
  %v164 = vpop.permute.xlu0 %163
  %167 = vst.msk [vmem:[%s7] sm:$0xf] %vm150, %v162
  %168 = vst.msk [vmem:[%s7 + $0x4] sm:$0xf] %vm150, %v164
  // Predicated region
  $region22: #{mixecn_forward.11} parent=0 // pred_check
    _
  $region23: #{mixecn_forward.11} parent=0 // pred_check_branch
    %170 = sbr.rel (0) target = $region25
  $region24: #{mixecn_forward.11} parent=0 // pred_region
    _
  $region25: #{mixecn_forward.11} parent=0 // pred_fallthru
    _
  // Predicated region
  $region26: #{mixecn_forward.11} parent=0 // pred_check
    _
  $region27: #{mixecn_forward.11} parent=0 // pred_check_branch
    %172 = sbr.rel (0) target = $region29
  $region28: #{mixecn_forward.11} parent=0 // pred_region
    _
  $region29: #{mixecn_forward.11} parent=0 // pred_fallthru
    _
  // Predicated region
  $region30: #{mixecn_forward.11} parent=0 // pred_check
    _
  $region31: #{mixecn_forward.11} parent=0 // pred_check_branch
    %174 = sbr.rel (0) target = $region33
  $region32: #{mixecn_forward.11} parent=0 // pred_region
    _
  $region33: #{mixecn_forward.11} parent=0 // pred_fallthru
    _
  // Predicated region
  $region34: #{mixecn_forward.11} parent=0 // pred_check
    _
  $region35: #{mixecn_forward.11} parent=0 // pred_check_branch
    %176 = sbr.rel (0) target = $region37
  $region36: #{mixecn_forward.11} parent=0 // pred_region
    _
  $region37: #{mixecn_forward.11} parent=0 // pred_fallthru
    _
  // Predicated region
  $region38: #{mixecn_forward.11} parent=0 // pred_check
    _
  $region39: #{mixecn_forward.11} parent=0 // pred_check_branch
    %178 = sbr.rel (0) target = $region41
  $region40: #{mixecn_forward.11} parent=0 // pred_region
    _
  $region41: #{mixecn_forward.11} parent=0 // pred_fallthru
    _
  // Predicated region
  $region42: #{mixecn_forward.11} parent=0 // pred_check
    _
  $region43: #{mixecn_forward.11} parent=0 // pred_check_branch
    %180 = sbr.rel (0) target = $region45
  $region44: #{mixecn_forward.11} parent=0 // pred_region
    _
  $region45: #{mixecn_forward.11} parent=0 // pred_fallthru
    _

// kernel: mixecn_forward.10
$region0: #{mixecn_forward.10}
  #allocation0 [shape = 'u32[]', space=smem, size = 0x4, offset = 0x4, fixed_abs, tag = 'smem constant byte address 0x4 - core index']
  #allocation1 [shape = 'u32[144,128]{1,0:T(1,128)}', space=vmem, size = 0x12000, scoped, tag = 'internal scratch']
  #allocation2 [shape = 'f32[16,32]{1,0:T(8,128)}', space=vmem, size = 0x2000, scoped, tag = 'scratch operand']
  %s0 = inlined_call_operand.vmem [shape: bf16[16,16], index: 0, kind: input, shape index: {}]
  %s1 = inlined_call_operand.vmem [shape: bf16[16,32], index: 1, kind: input, shape index: {}]
  %s2 = inlined_call_operand.vmem [shape: f32[1,32], index: 2, kind: input, shape index: {}]
  %s3 = inlined_call_operand.vmem [shape: bf16[16,32], index: 3, kind: output, shape index: {}]
  %s4 = sld [smem:[#allocation0]]
  $region30: #{mixecn_forward.10} parent=0
    _
  %s6 = ssub.s32 1, %s4
  %s7 = scalar_select 0, %s6, %s4
  // Predicated region
  $region2: #{mixecn_forward.10} parent=0 // pred_check
    _
  $region3: #{mixecn_forward.10} parent=0 // pred_check_branch
    %9 = sbr.rel (0) target = $region5
  $region4: #{mixecn_forward.10} parent=0 // pred_region
    _
  $region5: #{mixecn_forward.10} parent=0 // pred_fallthru
    _
  // Predicated region
  $region6: #{mixecn_forward.10} parent=0 // pred_check
    _
  $region7: #{mixecn_forward.10} parent=0 // pred_check_branch
    %11 = sbr.rel (0) target = $region9
  $region8: #{mixecn_forward.10} parent=0 // pred_region
    _
  $region9: #{mixecn_forward.10} parent=0 // pred_fallthru
    _
  // Predicated region
  $region10: #{mixecn_forward.10} parent=0 // pred_check
    _
  $region11: #{mixecn_forward.10} parent=0 // pred_check_branch
    %13 = sbr.rel (0) target = $region13
  $region12: #{mixecn_forward.10} parent=0 // pred_region
    _
  $region13: #{mixecn_forward.10} parent=0 // pred_fallthru
    _
  %p15 = scmp.eq.s32.totalorder 0, 0
  // Predicated region
  $region14: #{mixecn_forward.10} parent=0 // pred_check
    %p16 = pneg %p15
  $region15: #{mixecn_forward.10} parent=0 // pred_check_branch
    %18 = sbr.rel (%p16) target = $region17
  $region16: #{mixecn_forward.10} parent=0 // pred_region
    %vm19 = vcmask 261120
    %20 = vst.msk [vmem:[#allocation2] sm:$0xff] %vm19, 0.0
    %21 = vst.msk [vmem:[#allocation2 + $0x8] sm:$0xff] %vm19, 0.0
  $region17: #{mixecn_forward.10} parent=0 // pred_fallthru
    _
  %v22 = vld [vmem:[#allocation2] sm:$0xff]
  %v23 = vld [vmem:[#allocation2 + $0x8] sm:$0xff]
  %v24 = vld [vmem:[%s0] sm:$0xf]
  %v25 = vld [vmem:[%s0 + $0x4] sm:$0xf]
  %v26 = vld [vmem:[%s1] sm:$0xf]
  %v27 = vld [vmem:[%s1 + $0x4] sm:$0xf]
  %v30 = vunpack.c.l.b16 %v24
  %v31 = vunpack.c.l.b16 %v25
  %v32 = vpack.c.b16 %v31, %v30
  %v35 = vunpack.c.l.b16 %v26
  %v36 = vunpack.c.l.b16 %v27
  %v37 = vpack.c.b16 %v36, %v35
  %vm39 = vcmask 130048
  %v41 = vsel %vm39, %v32, 0
  %43 = vmatprep.subr.bf16.mxu0 0
  %44 = vmatpush1.bf16.msra.mxu0 %v37
  %45 = vmatprep.subr.bf16.mxu0 0
  %46 = vmatpush1.bf16.msra.mxu0 0
  %47 = vmatprep.subr.bf16.mxu0 0
  %48 = vmatpush1.bf16.msra.mxu0 0
  %49 = vmatprep.subr.bf16.mxu0 0
  %50 = vmatpush1.bf16.msra.mxu0 0
  %51 = vmatprep.subr.bf16.mxu0 0
  %52 = vmatpush1.bf16.msra.mxu0 0
  %53 = vmatprep.subr.bf16.mxu0 0
  %54 = vmatpush1.bf16.msra.mxu0 0
  %55 = vmatprep.subr.bf16.mxu0 0
  %56 = vmatpush1.bf16.msra.mxu0 0
  %57 = vmatprep.subr.bf16.mxu0 0
  %58 = vmatpush1.bf16.msra.mxu0 0
  %59 = vmatprep.subr.bf16.mxu0 0
  %60 = vmatpush1.bf16.msra.mxu0 0
  %61 = vmatprep.subr.bf16.mxu0 0
  %62 = vmatpush1.bf16.msra.mxu0 0
  %63 = vmatprep.subr.bf16.mxu0 0
  %64 = vmatpush1.bf16.msra.mxu0 0
  %65 = vmatprep.subr.bf16.mxu0 0
  %66 = vmatpush1.bf16.msra.mxu0 0
  %67 = vmatprep.subr.bf16.mxu0 0
  %68 = vmatpush1.bf16.msra.mxu0 0
  %69 = vmatprep.subr.bf16.mxu0 0
  %70 = vmatpush1.bf16.msra.mxu0 0
  %71 = vmatprep.subr.bf16.mxu0 0
  %72 = vmatpush1.bf16.msra.mxu0 0
  %73 = vmatprep.subr.bf16.mxu0 0
  %74 = vmatpush1.bf16.msra.mxu0 0
  %75 = vmatprep.mubr.bf16.mxu0 0
  %76 = vmatmul.mubr.bf16.gmra.mrb[0].mxu0 %v41
  %v77 = vpop.f32.mrb[0].mxu0
  %v78 = vadd.f32 0.0, %v77
  %v79 = vpop.f32.mrb[0].mxu0
  %v80 = vpop.f32.mrb[0].mxu0
  %v81 = vadd.f32 0.0, %v80
  %v82 = vpop.f32.mrb[0].mxu0
  %83 = vdwg.mxu0
  %v84 = vadd.f32 %v22, %v78
  %v85 = vadd.f32 %v23, %v81
  %vm86 = vcmask 261120
  %87 = vst.msk [vmem:[#allocation2] sm:$0xff] %vm86, %v84
  %88 = vst.msk [vmem:[#allocation2 + $0x8] sm:$0xff] %vm86, %v85
  // Predicated region
  $region18: #{mixecn_forward.10} parent=0 // pred_check
    %p89 = pneg %p15
  $region19: #{mixecn_forward.10} parent=0 // pred_check_branch
    %91 = sbr.rel (%p89) target = $region21
  $region20: #{mixecn_forward.10} parent=0 // pred_region
    %v92 = vld [vmem:[#allocation2] sm:$0xff]
    %v93 = vld [vmem:[#allocation2 + $0x8] sm:$0xff]
    %v94 = vld [vmem:[%s2] sm:$0x1]
    %v96 = vlaneseq
    %v97 = vshrl.u32 %v96, 7
    %v98 = vsub.s32 0, %v97
    %v99 = vrot.slane %v94, %v98
    %v101 = vadd.f32 %v92, %v99
    %v102 = vadd.f32 %v93, %v99
    %v103 = vpack.c.bf16 %v102, %v101
    %v105 = vunpack.c.l.b16 %v103
    %v106 = vunpack.c.h.b16 %v103
    %v107 = vpack.c.b16 %v105, %v105
    %v108 = vpack.c.b16 %v106, %v106
    %vm111 = vcmask 257024
    %112 = vst.msk [vmem:[%s3] sm:$0xf] %vm111, %v107
    %113 = vst.msk [vmem:[%s3 + $0x4] sm:$0xf] %vm111, %v108
  $region21: #{mixecn_forward.10} parent=0 // pred_fallthru
    _
  // Predicated region
  $region22: #{mixecn_forward.10} parent=0 // pred_check
    _
  $region23: #{mixecn_forward.10} parent=0 // pred_check_branch
    %115 = sbr.rel (0) target = $region25
  $region24: #{mixecn_forward.10} parent=0 // pred_region
    _
  $region25: #{mixecn_forward.10} parent=0 // pred_fallthru
    _
  // Predicated region
  $region26: #{mixecn_forward.10} parent=0 // pred_check
    _
  $region27: #{mixecn_forward.10} parent=0 // pred_check_branch
    %117 = sbr.rel (0) target = $region29
  $region28: #{mixecn_forward.10} parent=0 // pred_region
    _
  $region29: #{mixecn_forward.10} parent=0 // pred_fallthru
    _

// kernel: mixecn_forward.13
$region0: #{mixecn_forward.13}
  #allocation0 [shape = 'u32[]', space=smem, size = 0x4, offset = 0x4, fixed_abs, tag = 'smem constant byte address 0x4 - core index']
  #allocation1 [shape = 'u32[144,128]{1,0:T(1,128)}', space=vmem, size = 0x12000, scoped, tag = 'internal scratch']
  %s0 = inlined_call_operand.vmem [shape: bf16[16,32], index: 0, kind: input, shape index: {}]
  %s1 = inlined_call_operand.vmem [shape: bf16[32,32], index: 1, kind: input, shape index: {}]
  %s2 = inlined_call_operand.vmem [shape: f32[1,32], index: 2, kind: input, shape index: {}]
  %s3 = inlined_call_operand.vmem [shape: bf16[16,32], index: 3, kind: input, shape index: {}]
  %s4 = inlined_call_operand.vmem [shape: bf16[16,32], index: 4, kind: output, shape index: {}]
  %s5 = sld [smem:[#allocation0]]
  $region26: #{mixecn_forward.13} parent=0
    _
  %s7 = ssub.s32 1, %s5
  %s8 = scalar_select 0, %s7, %s5
  // Predicated region
  $region2: #{mixecn_forward.13} parent=0 // pred_check
    _
  $region3: #{mixecn_forward.13} parent=0 // pred_check_branch
    %10 = sbr.rel (0) target = $region5
  $region4: #{mixecn_forward.13} parent=0 // pred_region
    _
  $region5: #{mixecn_forward.13} parent=0 // pred_fallthru
    _
  // Predicated region
  $region6: #{mixecn_forward.13} parent=0 // pred_check
    _
  $region7: #{mixecn_forward.13} parent=0 // pred_check_branch
    %12 = sbr.rel (0) target = $region9
  $region8: #{mixecn_forward.13} parent=0 // pred_region
    _
  $region9: #{mixecn_forward.13} parent=0 // pred_fallthru
    _
  // Predicated region
  $region10: #{mixecn_forward.13} parent=0 // pred_check
    _
  $region11: #{mixecn_forward.13} parent=0 // pred_check_branch
    %14 = sbr.rel (0) target = $region13
  $region12: #{mixecn_forward.13} parent=0 // pred_region
    _
  $region13: #{mixecn_forward.13} parent=0 // pred_fallthru
    _
  // Predicated region
  $region14: #{mixecn_forward.13} parent=0 // pred_check
    _
  $region15: #{mixecn_forward.13} parent=0 // pred_check_branch
    %16 = sbr.rel (0) target = $region17
  $region16: #{mixecn_forward.13} parent=0 // pred_region
    _
  $region17: #{mixecn_forward.13} parent=0 // pred_fallthru
    _
  %v18 = vld [vmem:[%s0] sm:$0xf]
  %v19 = vld [vmem:[%s0 + $0x4] sm:$0xf]
  %v20 = vld [vmem:[%s1] sm:$0xf]
  %v21 = vld [vmem:[%s1 + $0x4] sm:$0xf]
  %v22 = vld [vmem:[%s1 + $0x8] sm:$0xf]
  %v23 = vld [vmem:[%s1 + $0xc] sm:$0xf]
  %v24 = vld [vmem:[%s2] sm:$0x1]
  %v26 = vlaneseq
  %v27 = vshrl.u32 %v26, 7
  %v28 = vsub.s32 0, %v27
  %v29 = vrot.slane %v24, %v28
  %v33 = vunpack.c.l.b16 %v18
  %v34 = vunpack.c.l.b16 %v19
  %v35 = vpack.c.b16 %v34, %v33
  %v40 = vunpack.c.l.b16 %v20
  %v41 = vunpack.c.l.b16 %v21
  %v42 = vunpack.c.l.b16 %v22
  %v43 = vunpack.c.l.b16 %v23
  %v44 = vpack.c.b16 %v41, %v40
  %v45 = vpack.c.b16 %v43, %v42
  %vm48 = vcmask 261120
  %v50 = vsel %vm48, %v35, 0
  %52 = vmatprep.subr.bf16.mxu0 0
  %53 = vmatpush1.bf16.msra.mxu0 %v44
  %54 = vmatprep.subr.bf16.mxu0 0
  %55 = vmatpush1.bf16.msra.mxu0 %v45
  %56 = vmatprep.subr.bf16.mxu0 0
  %57 = vmatpush1.bf16.msra.mxu0 0
  %58 = vmatprep.subr.bf16.mxu0 0
  %59 = vmatpush1.bf16.msra.mxu0 0
  %60 = vmatprep.subr.bf16.mxu0 0
  %61 = vmatpush1.bf16.msra.mxu0 0
  %62 = vmatprep.subr.bf16.mxu0 0
  %63 = vmatpush1.bf16.msra.mxu0 0
  %64 = vmatprep.subr.bf16.mxu0 0
  %65 = vmatpush1.bf16.msra.mxu0 0
  %66 = vmatprep.subr.bf16.mxu0 0
  %67 = vmatpush1.bf16.msra.mxu0 0
  %68 = vmatprep.subr.bf16.mxu0 0
  %69 = vmatpush1.bf16.msra.mxu0 0
  %70 = vmatprep.subr.bf16.mxu0 0
  %71 = vmatpush1.bf16.msra.mxu0 0
  %72 = vmatprep.subr.bf16.mxu0 0
  %73 = vmatpush1.bf16.msra.mxu0 0
  %74 = vmatprep.subr.bf16.mxu0 0
  %75 = vmatpush1.bf16.msra.mxu0 0
  %76 = vmatprep.subr.bf16.mxu0 0
  %77 = vmatpush1.bf16.msra.mxu0 0
  %78 = vmatprep.subr.bf16.mxu0 0
  %79 = vmatpush1.bf16.msra.mxu0 0
  %80 = vmatprep.subr.bf16.mxu0 0
  %81 = vmatpush1.bf16.msra.mxu0 0
  %82 = vmatprep.subr.bf16.mxu0 0
  %83 = vmatpush1.bf16.msra.mxu0 0
  %84 = vmatprep.mubr.bf16.mxu0 0
  %85 = vmatmul.mubr.bf16.gmra.mrb[0].mxu0 %v50
  %v86 = vpop.f32.mrb[0].mxu0
  %v87 = vadd.f32 %v29, %v86
  %v88 = vpop.f32.mrb[0].mxu0
  %v89 = vpop.f32.mrb[0].mxu0
  %v90 = vadd.f32 %v29, %v89
  %v91 = vpop.f32.mrb[0].mxu0
  %92 = vdwg.mxu0
  %v93 = vld [vmem:[%s3] sm:$0xf]
  %v94 = vld [vmem:[%s3 + $0x4] sm:$0xf]
  %v95 = vunpack.c.l.bf16 %v93
  %v96 = vunpack.c.l.bf16 %v94
  %v97 = vadd.f32 %v87, %v95
  %v98 = vadd.f32 %v90, %v96
  %v99 = vpack.c.bf16 %v98, %v97
  %v101 = vunpack.c.l.b16 %v99
  %v102 = vunpack.c.h.b16 %v99
  %v103 = vpack.c.b16 %v101, %v101
  %v104 = vpack.c.b16 %v102, %v102
  %vm107 = vcmask 257024
  %108 = vst.msk [vmem:[%s4] sm:$0xf] %vm107, %v103
  %109 = vst.msk [vmem:[%s4 + $0x4] sm:$0xf] %vm107, %v104
  // Predicated region
  $region18: #{mixecn_forward.13} parent=0 // pred_check
    _
  $region19: #{mixecn_forward.13} parent=0 // pred_check_branch
    %111 = sbr.rel (0) target = $region21
  $region20: #{mixecn_forward.13} parent=0 // pred_region
    _
  $region21: #{mixecn_forward.13} parent=0 // pred_fallthru
    _
  // Predicated region
  $region22: #{mixecn_forward.13} parent=0 // pred_check
    _
  $region23: #{mixecn_forward.13} parent=0 // pred_check_branch
    %113 = sbr.rel (0) target = $region25
  $region24: #{mixecn_forward.13} parent=0 // pred_region
    _
  $region25: #{mixecn_forward.13} parent=0 // pred_fallthru
    _

// kernel: mixecn_forward.12
$region0: #{mixecn_forward.12}
  #allocation0 [shape = 'u32[]', space=smem, size = 0x4, offset = 0x4, fixed_abs, tag = 'smem constant byte address 0x4 - core index']
  #allocation1 [shape = 'u32[144,128]{1,0:T(1,128)}', space=vmem, size = 0x12000, scoped, tag = 'internal scratch']
  #allocation2 [shape = 'f32[8,4]{1,0:T(8,128)}', space=vmem, size = 0x1000, scoped, tag = 'scratch operand']
  #allocation3 [shape = 'f32[8,4]{1,0:T(8,128)}', space=vmem, size = 0x1000, scoped, tag = 'scratch operand']
  #allocation4 [shape = 'f32[8,32]{1,0:T(8,128)}', space=vmem, size = 0x1000, scoped, tag = 'scratch operand']
  %s0 = inlined_call_operand.vmem [shape: bf16[2,8,32], index: 0, kind: input, shape index: {}]
  %s1 = inlined_call_operand.vmem [shape: bf16[2,8,32], index: 1, kind: input, shape index: {}]
  %s2 = inlined_call_operand.vmem [shape: bf16[2,8,32], index: 2, kind: input, shape index: {}]
  %s3 = inlined_call_operand.vmem [shape: bf16[2,8,32], index: 3, kind: output, shape index: {}]
  %s4 = sld [smem:[#allocation0]]
  $region53: #{mixecn_forward.12} parent=0
    _
  %s6 = ssub.s32 1, %s4
  %s7 = scalar_select 0, %s6, %s4
  loop: start=0, step=1, limit=4
  $region2: #{mixecn_forward.12} parent=0 // loop_pre_header
    _
  $region3: #{mixecn_forward.12} parent=0 // loop_header
    %s9 = sphi 0, %s13
    %p10 = scmp.ge.s32.totalorder %s9, 4
    %s16 = sphi 0, %s35
    %s17 = sphi 0, %s31
    %s18 = sphi 0, %s27
    %s19 = sphi 0, %s16
    %s20 = sphi 0, %s17
    %s21 = sphi 0, %s18
    %s22 = sphi 0, %s19
    %s23 = sphi 0, %s20
    %s24 = sphi 0, %s21
    %s40 = sphi 0, %s42
    %s43 = sphi 0, %s40
    %s44 = sphi 0, %s43
    %s60 = sphi 0, %s44
    %s68 = sphi 0, %s70
    %s71 = sphi 0, %s68
    %s72 = sphi 0, %s71
    %s88 = sphi 0, %s72
    %s96 = sphi 0, %s98
    %s99 = sphi 0, %s96
    %s100 = sphi 0, %s99
    %s116 = sphi 0, %s100
    %s124 = sphi 0, %s126
    %s127 = sphi 0, %s124
    %s128 = sphi 0, %s127
    %s144 = sphi 0, %s128
  $region4: #{mixecn_forward.12} parent=0 // loop_header_branch
    %12 = sbr.rel (%p10) target = $region8
  $region5: #{mixecn_forward.12} parent=0 // loop_body
    %s14 = ssub.s32 %s9, 1
    %s15 = ssub.s32 %s9, 2
    %s25 = sadd.s32 1, %s18
    %p26 = scmp.ge.s32.totalorder %s25, 1
    %s27 = scalar_select %p26, 0, %s25
    %s28 = sadd.s32 1, %s17
    %s29 = scalar_select %p26, %s28, %s17
    %p30 = scmp.ge.s32.totalorder %s29, 1
    %s31 = scalar_select %p30, 0, %s29
    %s32 = sadd.s32 1, %s16
    %s33 = scalar_select %p30, %s32, %s16
    %p34 = scmp.ge.s32.totalorder %s33, 2
    %s35 = scalar_select %p34, 0, %s33
    %s36 = ssub.s32 %s16, %s35
    %s37 = ssub.s32 %s17, %s31
    %s38 = sor.u32 %s36, %s37
    %p39 = scmp.eq.s32.totalorder %s38, 0
    %s41 = sadd.s32 %s40, 1
    %s42 = scalar_select %p39, %s40, %s41
    %p45 = pneg %p39
    %p46 = scmp.eq.s32.totalorder %s9, 1
    %p47 = por %p45, %p46
    %p48 = scmp.ne.s32.totalorder %s40, %s43
    %p49 = scmp.eq.s32.totalorder %s9, 0
    %p50 = por %p48, %p49
    %p51 = scmp.ne.s32.totalorder %s40, %s43
    %p52 = scmp.eq.s32.totalorder %s14, 1
    %p53 = por %p51, %p52
    %p54 = scmp.ne.s32.totalorder %s43, %s44
    %p55 = scmp.eq.s32.totalorder %s14, 0
    %p56 = por %p54, %p55
    %p57 = scmp.ne.s32.totalorder %s43, %s44
    %p58 = scmp.eq.s32.totalorder %s15, 1
    %p59 = por %p57, %p58
    %p61 = scmp.ne.s32.totalorder %s44, %s60
    %p62 = scmp.eq.s32.totalorder %s15, 0
    %p63 = por %p61, %p62
    %s64 = ssub.s32 %s16, %s35
    %s65 = ssub.s32 %s18, %s27
    %s66 = sor.u32 %s64, %s65
    %p67 = scmp.eq.s32.totalorder %s66, 0
    %s69 = sadd.s32 %s68, 1
    %s70 = scalar_select %p67, %s68, %s69
    %p73 = pneg %p67
    %p74 = scmp.eq.s32.totalorder %s9, 1
    %p75 = por %p73, %p74
    %p76 = scmp.ne.s32.totalorder %s68, %s71
    %p77 = scmp.eq.s32.totalorder %s9, 0
    %p78 = por %p76, %p77
    %p79 = scmp.ne.s32.totalorder %s68, %s71
    %p80 = scmp.eq.s32.totalorder %s14, 1
    %p81 = por %p79, %p80
    %p82 = scmp.ne.s32.totalorder %s71, %s72
    %p83 = scmp.eq.s32.totalorder %s14, 0
    %p84 = por %p82, %p83
    %p85 = scmp.ne.s32.totalorder %s71, %s72
    %p86 = scmp.eq.s32.totalorder %s15, 1
    %p87 = por %p85, %p86
    %p89 = scmp.ne.s32.totalorder %s72, %s88
    %p90 = scmp.eq.s32.totalorder %s15, 0
    %p91 = por %p89, %p90
    %s92 = ssub.s32 %s16, %s35
    %s93 = ssub.s32 %s18, %s27
    %s94 = sor.u32 %s92, %s93
    %p95 = scmp.eq.s32.totalorder %s94, 0
    %s97 = sadd.s32 %s96, 1
    %s98 = scalar_select %p95, %s96, %s97
    %p101 = pneg %p95
    %p102 = scmp.eq.s32.totalorder %s9, 1
    %p103 = por %p101, %p102
    %p104 = scmp.ne.s32.totalorder %s96, %s99
    %p105 = scmp.eq.s32.totalorder %s9, 0
    %p106 = por %p104, %p105
    %p107 = scmp.ne.s32.totalorder %s96, %s99
    %p108 = scmp.eq.s32.totalorder %s14, 1
    %p109 = por %p107, %p108
    %p110 = scmp.ne.s32.totalorder %s99, %s100
    %p111 = scmp.eq.s32.totalorder %s14, 0
    %p112 = por %p110, %p111
    %p113 = scmp.ne.s32.totalorder %s99, %s100
    %p114 = scmp.eq.s32.totalorder %s15, 1
    %p115 = por %p113, %p114
    %p117 = scmp.ne.s32.totalorder %s100, %s116
    %p118 = scmp.eq.s32.totalorder %s15, 0
    %p119 = por %p117, %p118
    %s120 = ssub.s32 %s16, %s35
    %s121 = ssub.s32 %s17, %s31
    %s122 = sor.u32 %s120, %s121
    %p123 = scmp.eq.s32.totalorder %s122, 0
    %s125 = sadd.s32 %s124, 1
    %s126 = scalar_select %p123, %s124, %s125
    %p129 = pneg %p123
    %p130 = scmp.eq.s32.totalorder %s9, 1
    %p131 = por %p129, %p130
    %p132 = scmp.ne.s32.totalorder %s124, %s127
    %p133 = scmp.eq.s32.totalorder %s9, 0
    %p134 = por %p132, %p133
    %p135 = scmp.ne.s32.totalorder %s124, %s127
    %p136 = scmp.eq.s32.totalorder %s14, 1
    %p137 = por %p135, %p136
    %p138 = scmp.ne.s32.totalorder %s127, %s128
    %p139 = scmp.eq.s32.totalorder %s14, 0
    %p140 = por %p138, %p139
    %p141 = scmp.ne.s32.totalorder %s127, %s128
    %p142 = scmp.eq.s32.totalorder %s15, 1
    %p143 = por %p141, %p142
    %p145 = scmp.ne.s32.totalorder %s128, %s144
    %p146 = scmp.eq.s32.totalorder %s15, 0
    %p147 = por %p145, %p146
    %p148 = scmp.le.s32.totalorder 1, %s9
    %p149 = scmp.lt.s32.totalorder %s9, 3
    %p150 = pnand %p148, %p149
    %p151 = pneg %p150
    // Predicated region
    $region9: #{mixecn_forward.12} parent=5 // pred_check
      _
    $region10: #{mixecn_forward.12} parent=5 // pred_check_branch
      %153 = sbr.rel (%p150) target = $region12
    $region11: #{mixecn_forward.12} parent=5 // pred_region
      %s154 = ssub.s32 %s9, 1
    $region12: #{mixecn_forward.12} parent=5 // pred_fallthru
      _
    %p155 = scmp.lt.s32.totalorder %s9, 2
    // Predicated region
    $region13: #{mixecn_forward.12} parent=5 // pred_check
      %p156 = pneg %p155
    $region14: #{mixecn_forward.12} parent=5 // pred_check_branch
      %158 = sbr.rel (%p156) target = $region16
    $region15: #{mixecn_forward.12} parent=5 // pred_region
      // Predicated region
      $region17: #{mixecn_forward.12} parent=15 // pred_check
        %p159 = pneg %p50
      $region18: #{mixecn_forward.12} parent=15 // pred_check_branch
        %161 = sbr.rel (%p159) target = $region20
      $region19: #{mixecn_forward.12} parent=15 // pred_region
        %p162 = scmp.lt.s32.totalorder %s16, 1
        %s163 = scalar_select %p162, %s16, 1
        %p164 = scmp.lt.s32.totalorder %s17, 0
        %s165 = scalar_select %p164, %s17, 0
        %s166 = sadd.s32 %s165, %s163
        %s167 = smul.addr %s166, 4
        %s168 = scalar_lea.vmem %s0, %s167
      $region20: #{mixecn_forward.12} parent=15 // pred_fallthru
        _
      // Predicated region
      $region21: #{mixecn_forward.12} parent=15 // pred_check
        %p169 = pneg %p78
      $region22: #{mixecn_forward.12} parent=15 // pred_check_branch
        %171 = sbr.rel (%p169) target = $region24
      $region23: #{mixecn_forward.12} parent=15 // pred_region
        %p172 = scmp.lt.s32.totalorder %s16, 1
        %s173 = scalar_select %p172, %s16, 1
        %p174 = scmp.lt.s32.totalorder %s18, 0
        %s175 = scalar_select %p174, %s18, 0
        %s176 = sadd.s32 %s175, %s173
        %s177 = smul.addr %s176, 4
        %s178 = scalar_lea.vmem %s1, %s177
      $region24: #{mixecn_forward.12} parent=15 // pred_fallthru
        _
      // Predicated region
      $region25: #{mixecn_forward.12} parent=15 // pred_check
        %p179 = pneg %p106
      $region26: #{mixecn_forward.12} parent=15 // pred_check_branch
        %181 = sbr.rel (%p179) target = $region28
      $region27: #{mixecn_forward.12} parent=15 // pred_region
        %p182 = scmp.lt.s32.totalorder %s16, 1
        %s183 = scalar_select %p182, %s16, 1
        %p184 = scmp.lt.s32.totalorder %s18, 0
        %s185 = scalar_select %p184, %s18, 0
        %s186 = sadd.s32 %s185, %s183
        %s187 = smul.addr %s186, 4
        %s188 = scalar_lea.vmem %s2, %s187
      $region28: #{mixecn_forward.12} parent=15 // pred_fallthru
        _
    $region16: #{mixecn_forward.12} parent=5 // pred_fallthru
      _
    %p189 = scmp.le.s32.totalorder 1, %s9
    %p190 = scmp.lt.s32.totalorder %s9, 3
    %p191 = pnand %p189, %p190
    %p192 = pneg %p191
    // Predicated region
    $region29: #{mixecn_forward.12} parent=5 // pred_check
      _
    $region30: #{mixecn_forward.12} parent=5 // pred_check_branch
      %194 = sbr.rel (%p191) target = $region32
    $region31: #{mixecn_forward.12} parent=5 // pred_region
      %s195 = ssub.s32 %s9, 1
      %p196 = scmp.lt.s32.totalorder %s19, 1
      %s197 = scalar_select %p196, %s19, 1
      %p198 = scmp.lt.s32.totalorder %s20, 0
      %s199 = scalar_select %p198, %s20, 0
      %s200 = sadd.s32 %s199, %s197
      %s201 = smul.addr %s200, 4
      %s202 = scalar_lea.vmem %s0, %s201
      %p203 = pneg %p56
      %p204 = pneg %p53
      %p205 = scmp.lt.s32.totalorder %s19, 1
      %s206 = scalar_select %p205, %s19, 1
      %p207 = scmp.lt.s32.totalorder %s21, 0
      %s208 = scalar_select %p207, %s21, 0
      %s209 = sadd.s32 %s208, %s206
      %s210 = smul.addr %s209, 4
      %s211 = scalar_lea.vmem %s1, %s210
      %p212 = pneg %p84
      %p213 = pneg %p81
      %p214 = scmp.lt.s32.totalorder %s19, 1
      %s215 = scalar_select %p214, %s19, 1
      %p216 = scmp.lt.s32.totalorder %s21, 0
      %s217 = scalar_select %p216, %s21, 0
      %s218 = sadd.s32 %s217, %s215
      %s219 = smul.addr %s218, 4
      %s220 = scalar_lea.vmem %s2, %s219
      %p221 = pneg %p112
      %p222 = pneg %p109
      %p223 = pneg %p140
      %p224 = pneg %p137
      %p225 = scmp.lt.s32.totalorder %s19, 1
      %s226 = scalar_select %p225, %s19, 1
      %p227 = scmp.lt.s32.totalorder %s20, 0
      %s228 = scalar_select %p227, %s20, 0
      %s229 = sadd.s32 %s228, %s226
      %s230 = smul.addr %s229, 4
      %s231 = scalar_lea.vmem %s3, %s230
      %p232 = scmp.lt.s32.totalorder %s19, 1
      %s233 = scalar_select %p232, %s19, 1
      %p234 = scmp.lt.s32.totalorder %s20, 0
      %s235 = scalar_select %p234, %s20, 0
      %s236 = sadd.s32 %s235, %s233
      %s237 = smul.addr %s236, 4
      %s238 = scalar_lea.vmem %s0, %s237
      %p239 = scmp.lt.s32.totalorder %s19, 1
      %s240 = scalar_select %p239, %s19, 1
      %p241 = scmp.lt.s32.totalorder %s21, 0
      %s242 = scalar_select %p241, %s21, 0
      %s243 = sadd.s32 %s242, %s240
      %s244 = smul.addr %s243, 4
      %s245 = scalar_lea.vmem %s1, %s244
      %p246 = scmp.lt.s32.totalorder %s19, 1
      %s247 = scalar_select %p246, %s19, 1
      %p248 = scmp.lt.s32.totalorder %s21, 0
      %s249 = scalar_select %p248, %s21, 0
      %s250 = sadd.s32 %s249, %s247
      %s251 = smul.addr %s250, 4
      %s252 = scalar_lea.vmem %s2, %s251
      %p253 = scmp.lt.s32.totalorder %s19, 1
      %s254 = scalar_select %p253, %s19, 1
      %p255 = scmp.lt.s32.totalorder %s20, 0
      %s256 = scalar_select %p255, %s20, 0
      %s257 = sadd.s32 %s256, %s254
      %s258 = smul.addr %s257, 4
      %s259 = scalar_lea.vmem %s3, %s258
      %p261 = scmp.eq.s32.totalorder %s21, 0
      // Predicated region
      $region33: #{mixecn_forward.12} parent=31 // pred_check
        %p262 = pneg %p261
      $region34: #{mixecn_forward.12} parent=31 // pred_check_branch
        %264 = sbr.rel (%p262) target = $region36
      $region35: #{mixecn_forward.12} parent=31 // pred_region
        %vm265 = vcmask 31744
        %266 = vst.msk [vmem:[#allocation2] sm:$0xff] %vm265, -inf
        %267 = vst.msk [vmem:[#allocation3] sm:$0xff] %vm265, 0.0
        %vm268 = vcmask 261120
        %269 = vst.msk [vmem:[#allocation4] sm:$0xff] %vm268, 0.0
      $region36: #{mixecn_forward.12} parent=31 // pred_fallthru
        _
      %v270 = vld [vmem:[%s238] sm:$0xf]
      %v271 = vld [vmem:[%s245] sm:$0xf]
      %v272 = vld [vmem:[%s252] sm:$0xf]
      %vm273 = vcmask 64512
      %v275 = vsel %vm273, %v270, 0
      %v278 = vsel %vm273, %v271, 0
      %280 = vmatprep.subr.bf16.mxu0 0
      %281 = vmatpush1.bf16.xpose.msra.mxu0 %v278
      %282 = vmatprep.subr.bf16.mxu0 0
      %283 = vmatpush1.bf16.xpose.msra.mxu0 0
      %284 = vmatprep.subr.bf16.mxu0 0
      %285 = vmatpush1.bf16.xpose.msra.mxu0 0
      %286 = vmatprep.subr.bf16.mxu0 0
      %287 = vmatpush1.bf16.xpose.msra.mxu0 0
      %288 = vmatprep.subr.bf16.mxu0 0
      %289 = vmatpush1.bf16.xpose.msra.mxu0 0
      %290 = vmatprep.subr.bf16.mxu0 0
      %291 = vmatpush1.bf16.xpose.msra.mxu0 0
      %292 = vmatprep.subr.bf16.mxu0 0
      %293 = vmatpush1.bf16.xpose.msra.mxu0 0
      %294 = vmatprep.subr.bf16.mxu0 0
      %295 = vmatpush1.bf16.xpose.msra.mxu0 0
      %296 = vmatprep.subr.bf16.mxu0 0
      %297 = vmatpush1.bf16.xpose.msra.mxu0 0
      %298 = vmatprep.subr.bf16.mxu0 0
      %299 = vmatpush1.bf16.xpose.msra.mxu0 0
      %300 = vmatprep.subr.bf16.mxu0 0
      %301 = vmatpush1.bf16.xpose.msra.mxu0 0
      %302 = vmatprep.subr.bf16.mxu0 0
      %303 = vmatpush1.bf16.xpose.msra.mxu0 0
      %304 = vmatprep.subr.bf16.mxu0 0
      %305 = vmatpush1.bf16.xpose.msra.mxu0 0
      %306 = vmatprep.subr.bf16.mxu0 0
      %307 = vmatpush1.bf16.xpose.msra.mxu0 0
      %308 = vmatprep.subr.bf16.mxu0 0
      %309 = vmatpush1.bf16.xpose.msra.mxu0 0
      %310 = vmatprep.subr.bf16.mxu0 0
      %311 = vmatpush1.bf16.xpose.msra.mxu0 0
      %312 = vmatprep.mubr.bf16.mxu0 0
      %313 = vmatmul.mubr.bf16.gmra.mrb[0].mxu0 %v275
      %v314 = vpop.f32.mrb[0].mxu0
      %v315 = vadd.f32 0.0, %v314
      %v316 = vpop.f32.mrb[0].mxu0
      %v317 = vpop.f32.mrb[0].mxu0
      %v318 = vpop.f32.mrb[0].mxu0
      %319 = vdwg.mxu0
      %v320 = vld [vmem:[#allocation2] sm:$0xff]
      %v321 = vsel %vm273, %v315, -inf
      %322 = vmax.xlane.f32.xlu0 %v321
      %v323 = vpop.xlane.xlu0 %322
      %v324 = vmax.f32 %v320, %v323
      %v325 = vsub.f32 %v320, %v324
      %v326 = vmul.f32 %v325, 1.442695
      %v327 = vpow.pop %v326
      %329 = vset.pattern.permute.xlu0 0
      %330 = vperm.xlu0 %329, %v324
      %v331 = vpop.permute.xlu0 %330
      %v333 = vsub.f32 %v315, %v331
      %v334 = vmul.f32 %v333, 1.442695
      %v335 = vpow.pop %v334
      %v336 = vld [vmem:[#allocation3] sm:$0xff]
      %v337 = vmul.f32 %v327, %v336
      %v338 = vsel %vm273, %v335, 0.0
      %339 = vadd.xlane.f32.xlu0 %v338
      %v340 = vpop.xlane.xlu0 %339
      %v341 = vadd.f32 %v337, %v340
      %vm342 = vcmask 7168
      %343 = vst.msk [vmem:[#allocation3] sm:$0xff] %vm342, %v341
      %v344 = vld [vmem:[#allocation4] sm:$0xff]
      %346 = vset.pattern.permute.xlu0 0
      %347 = vperm.xlu0 %346, %v327
      %v348 = vpop.permute.xlu0 %347
      %v350 = vmul.f32 %v348, %v344
      %v351 = vpack.c.bf16 %v335, %v335
      %v353 = vsel %vm273, %v351, 0
      %vm355 = vcmask 1043456
      %v357 = vsel %vm355, %v272, 0
      %359 = vmatprep.subr.bf16.mxu0 0
      %360 = vmatpush1.bf16.msra.mxu0 %v357
      %361 = vmatprep.subr.bf16.mxu0 0
      %362 = vmatpush1.bf16.msra.mxu0 0
      %363 = vmatprep.subr.bf16.mxu0 0
      %364 = vmatpush1.bf16.msra.mxu0 0
      %365 = vmatprep.subr.bf16.mxu0 0
      %366 = vmatpush1.bf16.msra.mxu0 0
      %367 = vmatprep.subr.bf16.mxu0 0
      %368 = vmatpush1.bf16.msra.mxu0 0
      %369 = vmatprep.subr.bf16.mxu0 0
      %370 = vmatpush1.bf16.msra.mxu0 0
      %371 = vmatprep.subr.bf16.mxu0 0
      %372 = vmatpush1.bf16.msra.mxu0 0
      %373 = vmatprep.subr.bf16.mxu0 0
      %374 = vmatpush1.bf16.msra.mxu0 0
      %375 = vmatprep.subr.bf16.mxu0 0
      %376 = vmatpush1.bf16.msra.mxu0 0
      %377 = vmatprep.subr.bf16.mxu0 0
      %378 = vmatpush1.bf16.msra.mxu0 0
      %379 = vmatprep.subr.bf16.mxu0 0
      %380 = vmatpush1.bf16.msra.mxu0 0
      %381 = vmatprep.subr.bf16.mxu0 0
      %382 = vmatpush1.bf16.msra.mxu0 0
      %383 = vmatprep.subr.bf16.mxu0 0
      %384 = vmatpush1.bf16.msra.mxu0 0
      %385 = vmatprep.subr.bf16.mxu0 0
      %386 = vmatpush1.bf16.msra.mxu0 0
      %387 = vmatprep.subr.bf16.mxu0 0
      %388 = vmatpush1.bf16.msra.mxu0 0
      %389 = vmatprep.subr.bf16.mxu0 0
      %390 = vmatpush1.bf16.msra.mxu0 0
      %391 = vmatprep.mubr.bf16.mxu0 0
      %392 = vmatmul.mubr.bf16.gmra.mrb[0].mxu0 %v353
      %v393 = vpop.f32.mrb[0].mxu0
      %v394 = vadd.f32 0.0, %v393
      %v395 = vpop.f32.mrb[0].mxu0
      %v396 = vpop.f32.mrb[0].mxu0
      %v397 = vpop.f32.mrb[0].mxu0
      %398 = vdwg.mxu0
      %v399 = vadd.f32 %v350, %v394
      %400 = vst.msk [vmem:[#allocation4] sm:$0xff] %vm273, %v399
      %401 = vst.msk [vmem:[#allocation2] sm:$0xff] %vm342, %v324
      %v403 = vunpack.c.l.b16 %v270
      %v404 = vpack.c.b16 %v403, %v403
      %405 = vrot.lane.b32.xlu0 %v404, 120
      %v406 = vpop.permute.xlu0 %405
      %v408 = vunpack.c.l.b16 %v271
      %v409 = vpack.c.b16 %v408, %v408
      %410 = vrot.lane.b32.xlu0 %v409, 120
      %v411 = vpop.permute.xlu0 %410
      %v413 = vsel %vm273, %v406, 0
      %v416 = vsel %vm273, %v411, 0
      %418 = vmatprep.subr.bf16.mxu0 0
      %419 = vmatpush1.bf16.xpose.msra.mxu0 %v416
      %420 = vmatprep.subr.bf16.mxu0 0
      %421 = vmatpush1.bf16.xpose.msra.mxu0 0
      %422 = vmatprep.subr.bf16.mxu0 0
      %423 = vmatpush1.bf16.xpose.msra.mxu0 0
      %424 = vmatprep.subr.bf16.mxu0 0
      %425 = vmatpush1.bf16.xpose.msra.mxu0 0
      %426 = vmatprep.subr.bf16.mxu0 0
      %427 = vmatpush1.bf16.xpose.msra.mxu0 0
      %428 = vmatprep.subr.bf16.mxu0 0
      %429 = vmatpush1.bf16.xpose.msra.mxu0 0
      %430 = vmatprep.subr.bf16.mxu0 0
      %431 = vmatpush1.bf16.xpose.msra.mxu0 0
      %432 = vmatprep.subr.bf16.mxu0 0
      %433 = vmatpush1.bf16.xpose.msra.mxu0 0
      %434 = vmatprep.subr.bf16.mxu0 0
      %435 = vmatpush1.bf16.xpose.msra.mxu0 0
      %436 = vmatprep.subr.bf16.mxu0 0
      %437 = vmatpush1.bf16.xpose.msra.mxu0 0
      %438 = vmatprep.subr.bf16.mxu0 0
      %439 = vmatpush1.bf16.xpose.msra.mxu0 0
      %440 = vmatprep.subr.bf16.mxu0 0
      %441 = vmatpush1.bf16.xpose.msra.mxu0 0
      %442 = vmatprep.subr.bf16.mxu0 0
      %443 = vmatpush1.bf16.xpose.msra.mxu0 0
      %444 = vmatprep.subr.bf16.mxu0 0
      %445 = vmatpush1.bf16.xpose.msra.mxu0 0
      %446 = vmatprep.subr.bf16.mxu0 0
      %447 = vmatpush1.bf16.xpose.msra.mxu0 0
      %448 = vmatprep.subr.bf16.mxu0 0
      %449 = vmatpush1.bf16.xpose.msra.mxu0 0
      %450 = vmatprep.mubr.bf16.mxu0 0
      %451 = vmatmul.mubr.bf16.gmra.mrb[0].mxu0 %v413
      %v452 = vpop.f32.mrb[0].mxu0
      %v453 = vadd.f32 0.0, %v452
      %v454 = vpop.f32.mrb[0].mxu0
      %v455 = vpop.f32.mrb[0].mxu0
      %v456 = vpop.f32.mrb[0].mxu0
      %457 = vdwg.mxu0
      %v458 = vld [vmem:[#allocation2] sm:$0xff]
      %v459 = vsel %vm273, %v453, -inf
      %460 = vmax.xlane.f32.xlu0 %v459
      %v461 = vpop.xlane.xlu0 %460
      %v462 = vmax.f32 %v458, %v461
      %v463 = vsub.f32 %v458, %v462
      %v464 = vmul.f32 %v463, 1.442695
      %v465 = vpow.pop %v464
      %467 = vset.pattern.permute.xlu0 1
      %468 = vperm.xlu0 %467, %v462
      %v469 = vpop.permute.xlu0 %468
      %v471 = vsub.f32 %v453, %v469
      %v472 = vmul.f32 %v471, 1.442695
      %v473 = vpow.pop %v472
      %v474 = vld [vmem:[#allocation3] sm:$0xff]
      %v475 = vmul.f32 %v465, %v474
      %v476 = vsel %vm273, %v473, 0.0
      %477 = vadd.xlane.f32.xlu0 %v476
      %v478 = vpop.xlane.xlu0 %477
      %v479 = vadd.f32 %v475, %v478
      %vm480 = vcmask 15368
      %481 = vst.msk [vmem:[#allocation3] sm:$0xff] %vm480, %v479
      %v482 = vld [vmem:[#allocation4] sm:$0xff]
      %484 = vset.pattern.permute.xlu0 1
      %485 = vperm.xlu0 %484, %v465
      %v486 = vpop.permute.xlu0 %485
      %v488 = vmul.f32 %v486, %v482
      %v489 = vpack.c.bf16 %v473, %v473
      %v491 = vunpack.c.l.b16 %v272
      %v492 = vpack.c.b16 %v491, %v491
      %493 = vrot.lane.b32.xlu0 %v492, 120
      %v494 = vpop.permute.xlu0 %493
      %v496 = vsel %vm273, %v489, 0
      %v499 = vsel %vm355, %v494, 0
      %501 = vmatprep.subr.bf16.mxu0 0
      %502 = vmatpush1.bf16.msra.mxu0 %v499
      %503 = vmatprep.subr.bf16.mxu0 0
      %504 = vmatpush1.bf16.msra.mxu0 0
      %505 = vmatprep.subr.bf16.mxu0 0
      %506 = vmatpush1.bf16.msra.mxu0 0
      %507 = vmatprep.subr.bf16.mxu0 0
      %508 = vmatpush1.bf16.msra.mxu0 0
      %509 = vmatprep.subr.bf16.mxu0 0
      %510 = vmatpush1.bf16.msra.mxu0 0
      %511 = vmatprep.subr.bf16.mxu0 0
      %512 = vmatpush1.bf16.msra.mxu0 0
      %513 = vmatprep.subr.bf16.mxu0 0
      %514 = vmatpush1.bf16.msra.mxu0 0
      %515 = vmatprep.subr.bf16.mxu0 0
      %516 = vmatpush1.bf16.msra.mxu0 0
      %517 = vmatprep.subr.bf16.mxu0 0
      %518 = vmatpush1.bf16.msra.mxu0 0
      %519 = vmatprep.subr.bf16.mxu0 0
      %520 = vmatpush1.bf16.msra.mxu0 0
      %521 = vmatprep.subr.bf16.mxu0 0
      %522 = vmatpush1.bf16.msra.mxu0 0
      %523 = vmatprep.subr.bf16.mxu0 0
      %524 = vmatpush1.bf16.msra.mxu0 0
      %525 = vmatprep.subr.bf16.mxu0 0
      %526 = vmatpush1.bf16.msra.mxu0 0
      %527 = vmatprep.subr.bf16.mxu0 0
      %528 = vmatpush1.bf16.msra.mxu0 0
      %529 = vmatprep.subr.bf16.mxu0 0
      %530 = vmatpush1.bf16.msra.mxu0 0
      %531 = vmatprep.subr.bf16.mxu0 0
      %532 = vmatpush1.bf16.msra.mxu0 0
      %533 = vmatprep.mubr.bf16.mxu0 0
      %534 = vmatmul.mubr.bf16.gmra.mrb[0].mxu0 %v496
      %v535 = vpop.f32.mrb[0].mxu0
      %v536 = vadd.f32 0.0, %v535
      %v537 = vpop.f32.mrb[0].mxu0
      %v538 = vpop.f32.mrb[0].mxu0
      %v539 = vpop.f32.mrb[0].mxu0
      %540 = vdwg.mxu0
      %542 = vrot.lane.b32.xlu0 %v536, 8
      %v543 = vpop.permute.xlu0 %542
      %v545 = vadd.f32 %v488, %v543
      %vm546 = vcmask 130112
      %547 = vst.msk [vmem:[#allocation4] sm:$0xff] %vm546, %v545
      %548 = vst.msk [vmem:[#allocation2] sm:$0xff] %vm480, %v462
      %549 = vrot.lane.b32.xlu0 %v404, 112
      %v550 = vpop.permute.xlu0 %549
      %551 = vrot.lane.b32.xlu0 %v409, 112
      %v552 = vpop.permute.xlu0 %551
      %v554 = vsel %vm273, %v550, 0
      %v557 = vsel %vm273, %v552, 0
      %559 = vmatprep.subr.bf16.mxu0 0
      %560 = vmatpush1.bf16.xpose.msra.mxu0 %v557
      %561 = vmatprep.subr.bf16.mxu0 0
      %562 = vmatpush1.bf16.xpose.msra.mxu0 0
      %563 = vmatprep.subr.bf16.mxu0 0
      %564 = vmatpush1.bf16.xpose.msra.mxu0 0
      %565 = vmatprep.subr.bf16.mxu0 0
      %566 = vmatpush1.bf16.xpose.msra.mxu0 0
      %567 = vmatprep.subr.bf16.mxu0 0
      %568 = vmatpush1.bf16.xpose.msra.mxu0 0
      %569 = vmatprep.subr.bf16.mxu0 0
      %570 = vmatpush1.bf16.xpose.msra.mxu0 0
      %571 = vmatprep.subr.bf16.mxu0 0
      %572 = vmatpush1.bf16.xpose.msra.mxu0 0
      %573 = vmatprep.subr.bf16.mxu0 0
      %574 = vmatpush1.bf16.xpose.msra.mxu0 0
      %575 = vmatprep.subr.bf16.mxu0 0
      %576 = vmatpush1.bf16.xpose.msra.mxu0 0
      %577 = vmatprep.subr.bf16.mxu0 0
      %578 = vmatpush1.bf16.xpose.msra.mxu0 0
      %579 = vmatprep.subr.bf16.mxu0 0
      %580 = vmatpush1.bf16.xpose.msra.mxu0 0
      %581 = vmatprep.subr.bf16.mxu0 0
      %582 = vmatpush1.bf16.xpose.msra.mxu0 0
      %583 = vmatprep.subr.bf16.mxu0 0
      %584 = vmatpush1.bf16.xpose.msra.mxu0 0
      %585 = vmatprep.subr.bf16.mxu0 0
      %586 = vmatpush1.bf16.xpose.msra.mxu0 0
      %587 = vmatprep.subr.bf16.mxu0 0
      %588 = vmatpush1.bf16.xpose.msra.mxu0 0
      %589 = vmatprep.subr.bf16.mxu0 0
      %590 = vmatpush1.bf16.xpose.msra.mxu0 0
      %591 = vmatprep.mubr.bf16.mxu0 0
      %592 = vmatmul.mubr.bf16.gmra.mrb[0].mxu0 %v554
      %v593 = vpop.f32.mrb[0].mxu0
      %v594 = vadd.f32 0.0, %v593
      %v595 = vpop.f32.mrb[0].mxu0
      %v596 = vpop.f32.mrb[0].mxu0
      %v597 = vpop.f32.mrb[0].mxu0
      %598 = vdwg.mxu0
      %v599 = vld [vmem:[#allocation2] sm:$0xff]
      %v600 = vsel %vm273, %v594, -inf
      %601 = vmax.xlane.f32.xlu0 %v600
      %v602 = vpop.xlane.xlu0 %601
      %v603 = vmax.f32 %v599, %v602
      %v604 = vsub.f32 %v599, %v603
      %v605 = vmul.f32 %v604, 1.442695
      %v606 = vpow.pop %v605
      %608 = vset.pattern.permute.xlu0 2
      %609 = vperm.xlu0 %608, %v603
      %v610 = vpop.permute.xlu0 %609
      %v612 = vsub.f32 %v594, %v610
      %v613 = vmul.f32 %v612, 1.442695
      %v614 = vpow.pop %v613
      %v615 = vld [vmem:[#allocation3] sm:$0xff]
      %v616 = vmul.f32 %v606, %v615
      %v617 = vsel %vm273, %v614, 0.0
      %618 = vadd.xlane.f32.xlu0 %v617
      %v619 = vpop.xlane.xlu0 %618
      %v620 = vadd.f32 %v616, %v619
      %vm621 = vcmask 23568
      %622 = vst.msk [vmem:[#allocation3] sm:$0xff] %vm621, %v620
      %v623 = vld [vmem:[#allocation4] sm:$0xff]
      %625 = vset.pattern.permute.xlu0 2
      %626 = vperm.xlu0 %625, %v606
      %v627 = vpop.permute.xlu0 %626
      %v629 = vmul.f32 %v627, %v623
      %v630 = vpack.c.bf16 %v614, %v614
      %631 = vrot.lane.b32.xlu0 %v492, 112
      %v632 = vpop.permute.xlu0 %631
      %v634 = vsel %vm273, %v630, 0
      %v637 = vsel %vm355, %v632, 0
      %639 = vmatprep.subr.bf16.mxu0 0
      %640 = vmatpush1.bf16.msra.mxu0 %v637
      %641 = vmatprep.subr.bf16.mxu0 0
      %642 = vmatpush1.bf16.msra.mxu0 0
      %643 = vmatprep.subr.bf16.mxu0 0
      %644 = vmatpush1.bf16.msra.mxu0 0
      %645 = vmatprep.subr.bf16.mxu0 0
      %646 = vmatpush1.bf16.msra.mxu0 0
      %647 = vmatprep.subr.bf16.mxu0 0
      %648 = vmatpush1.bf16.msra.mxu0 0
      %649 = vmatprep.subr.bf16.mxu0 0
      %650 = vmatpush1.bf16.msra.mxu0 0
      %651 = vmatprep.subr.bf16.mxu0 0
      %652 = vmatpush1.bf16.msra.mxu0 0
      %653 = vmatprep.subr.bf16.mxu0 0
      %654 = vmatpush1.bf16.msra.mxu0 0
      %655 = vmatprep.subr.bf16.mxu0 0
      %656 = vmatpush1.bf16.msra.mxu0 0
      %657 = vmatprep.subr.bf16.mxu0 0
      %658 = vmatpush1.bf16.msra.mxu0 0
      %659 = vmatprep.subr.bf16.mxu0 0
      %660 = vmatpush1.bf16.msra.mxu0 0
      %661 = vmatprep.subr.bf16.mxu0 0
      %662 = vmatpush1.bf16.msra.mxu0 0
      %663 = vmatprep.subr.bf16.mxu0 0
      %664 = vmatpush1.bf16.msra.mxu0 0
      %665 = vmatprep.subr.bf16.mxu0 0
      %666 = vmatpush1.bf16.msra.mxu0 0
      %667 = vmatprep.subr.bf16.mxu0 0
      %668 = vmatpush1.bf16.msra.mxu0 0
      %669 = vmatprep.subr.bf16.mxu0 0
      %670 = vmatpush1.bf16.msra.mxu0 0
      %671 = vmatprep.mubr.bf16.mxu0 0
      %672 = vmatmul.mubr.bf16.gmra.mrb[0].mxu0 %v634
      %v673 = vpop.f32.mrb[0].mxu0
      %v674 = vadd.f32 0.0, %v673
      %v675 = vpop.f32.mrb[0].mxu0
      %v676 = vpop.f32.mrb[0].mxu0
      %v677 = vpop.f32.mrb[0].mxu0
      %678 = vdwg.mxu0
      %680 = vrot.lane.b32.xlu0 %v674, 16
      %v681 = vpop.permute.xlu0 %680
      %v683 = vadd.f32 %v629, %v681
      %vm684 = vcmask 195712
      %685 = vst.msk [vmem:[#allocation4] sm:$0xff] %vm684, %v683
      %686 = vst.msk [vmem:[#allocation2] sm:$0xff] %vm621, %v603
      %687 = vrot.lane.b32.xlu0 %v404, 104
      %v688 = vpop.permute.xlu0 %687
      %689 = vrot.lane.b32.xlu0 %v409, 104
      %v690 = vpop.permute.xlu0 %689
      %v692 = vsel %vm273, %v688, 0
      %v695 = vsel %vm273, %v690, 0
      %697 = vmatprep.subr.bf16.mxu0 0
      %698 = vmatpush1.bf16.xpose.msra.mxu0 %v695
      %699 = vmatprep.subr.bf16.mxu0 0
      %700 = vmatpush1.bf16.xpose.msra.mxu0 0
      %701 = vmatprep.subr.bf16.mxu0 0
      %702 = vmatpush1.bf16.xpose.msra.mxu0 0
      %703 = vmatprep.subr.bf16.mxu0 0
      %704 = vmatpush1.bf16.xpose.msra.mxu0 0
      %705 = vmatprep.subr.bf16.mxu0 0
      %706 = vmatpush1.bf16.xpose.msra.mxu0 0
      %707 = vmatprep.subr.bf16.mxu0 0
      %708 = vmatpush1.bf16.xpose.msra.mxu0 0
      %709 = vmatprep.subr.bf16.mxu0 0
      %710 = vmatpush1.bf16.xpose.msra.mxu0 0
      %711 = vmatprep.subr.bf16.mxu0 0
      %712 = vmatpush1.bf16.xpose.msra.mxu0 0
      %713 = vmatprep.subr.bf16.mxu0 0
      %714 = vmatpush1.bf16.xpose.msra.mxu0 0
      %715 = vmatprep.subr.bf16.mxu0 0
      %716 = vmatpush1.bf16.xpose.msra.mxu0 0
      %717 = vmatprep.subr.bf16.mxu0 0
      %718 = vmatpush1.bf16.xpose.msra.mxu0 0
      %719 = vmatprep.subr.bf16.mxu0 0
      %720 = vmatpush1.bf16.xpose.msra.mxu0 0
      %721 = vmatprep.subr.bf16.mxu0 0
      %722 = vmatpush1.bf16.xpose.msra.mxu0 0
      %723 = vmatprep.subr.bf16.mxu0 0
      %724 = vmatpush1.bf16.xpose.msra.mxu0 0
      %725 = vmatprep.subr.bf16.mxu0 0
      %726 = vmatpush1.bf16.xpose.msra.mxu0 0
      %727 = vmatprep.subr.bf16.mxu0 0
      %728 = vmatpush1.bf16.xpose.msra.mxu0 0
      %729 = vmatprep.mubr.bf16.mxu0 0
      %730 = vmatmul.mubr.bf16.gmra.mrb[0].mxu0 %v692
      %v731 = vpop.f32.mrb[0].mxu0
      %v732 = vadd.f32 0.0, %v731
      %v733 = vpop.f32.mrb[0].mxu0
      %v734 = vpop.f32.mrb[0].mxu0
      %v735 = vpop.f32.mrb[0].mxu0
      %736 = vdwg.mxu0
      %v737 = vld [vmem:[#allocation2] sm:$0xff]
      %v738 = vsel %vm273, %v732, -inf
      %739 = vmax.xlane.f32.xlu0 %v738
      %v740 = vpop.xlane.xlu0 %739
      %v741 = vmax.f32 %v737, %v740
      %v742 = vsub.f32 %v737, %v741
      %v743 = vmul.f32 %v742, 1.442695
      %v744 = vpow.pop %v743
      %746 = vset.pattern.permute.xlu0 3
      %747 = vperm.xlu0 %746, %v741
      %v748 = vpop.permute.xlu0 %747
      %v750 = vsub.f32 %v732, %v748
      %v751 = vmul.f32 %v750, 1.442695
      %v752 = vpow.pop %v751
      %v753 = vld [vmem:[#allocation3] sm:$0xff]
      %v754 = vmul.f32 %v744, %v753
      %v755 = vsel %vm273, %v752, 0.0
      %756 = vadd.xlane.f32.xlu0 %v755
      %v757 = vpop.xlane.xlu0 %756
      %v758 = vadd.f32 %v754, %v757
      %vm759 = vcmask 31768
      %760 = vst.msk [vmem:[#allocation3] sm:$0xff] %vm759, %v758
      %v761 = vld [vmem:[#allocation4] sm:$0xff]
      %763 = vset.pattern.permute.xlu0 3
      %764 = vperm.xlu0 %763, %v744
      %v765 = vpop.permute.xlu0 %764
      %v767 = vmul.f32 %v765, %v761
      %v768 = vpack.c.bf16 %v752, %v752
      %769 = vrot.lane.b32.xlu0 %v492, 104
      %v770 = vpop.permute.xlu0 %769
      %v772 = vsel %vm273, %v768, 0
      %v775 = vsel %vm355, %v770, 0
      %777 = vmatprep.subr.bf16.mxu0 0
      %778 = vmatpush1.bf16.msra.mxu0 %v775
      %779 = vmatprep.subr.bf16.mxu0 0
      %780 = vmatpush1.bf16.msra.mxu0 0
      %781 = vmatprep.subr.bf16.mxu0 0
      %782 = vmatpush1.bf16.msra.mxu0 0
      %783 = vmatprep.subr.bf16.mxu0 0
      %784 = vmatpush1.bf16.msra.mxu0 0
      %785 = vmatprep.subr.bf16.mxu0 0
      %786 = vmatpush1.bf16.msra.mxu0 0
      %787 = vmatprep.subr.bf16.mxu0 0
      %788 = vmatpush1.bf16.msra.mxu0 0
      %789 = vmatprep.subr.bf16.mxu0 0
      %790 = vmatpush1.bf16.msra.mxu0 0
      %791 = vmatprep.subr.bf16.mxu0 0
      %792 = vmatpush1.bf16.msra.mxu0 0
      %793 = vmatprep.subr.bf16.mxu0 0
      %794 = vmatpush1.bf16.msra.mxu0 0
      %795 = vmatprep.subr.bf16.mxu0 0
      %796 = vmatpush1.bf16.msra.mxu0 0
      %797 = vmatprep.subr.bf16.mxu0 0
      %798 = vmatpush1.bf16.msra.mxu0 0
      %799 = vmatprep.subr.bf16.mxu0 0
      %800 = vmatpush1.bf16.msra.mxu0 0
      %801 = vmatprep.subr.bf16.mxu0 0
      %802 = vmatpush1.bf16.msra.mxu0 0
      %803 = vmatprep.subr.bf16.mxu0 0
      %804 = vmatpush1.bf16.msra.mxu0 0
      %805 = vmatprep.subr.bf16.mxu0 0
      %806 = vmatpush1.bf16.msra.mxu0 0
      %807 = vmatprep.subr.bf16.mxu0 0
      %808 = vmatpush1.bf16.msra.mxu0 0
      %809 = vmatprep.mubr.bf16.mxu0 0
      %810 = vmatmul.mubr.bf16.gmra.mrb[0].mxu0 %v772
      %v811 = vpop.f32.mrb[0].mxu0
      %v812 = vadd.f32 0.0, %v811
      %v813 = vpop.f32.mrb[0].mxu0
      %v814 = vpop.f32.mrb[0].mxu0
      %v815 = vpop.f32.mrb[0].mxu0
      %816 = vdwg.mxu0
      %818 = vrot.lane.b32.xlu0 %v812, 24
      %v819 = vpop.permute.xlu0 %818
      %v821 = vadd.f32 %v767, %v819
      %vm822 = vcmask 261312
      %823 = vst.msk [vmem:[#allocation4] sm:$0xff] %vm822, %v821
      %824 = vst.msk [vmem:[#allocation2] sm:$0xff] %vm759, %v741
      // Predicated region
      $region37: #{mixecn_forward.12} parent=31 // pred_check
        %p825 = pneg %p261
      $region38: #{mixecn_forward.12} parent=31 // pred_check_branch
        %827 = sbr.rel (%p825) target = $region40
      $region39: #{mixecn_forward.12} parent=31 // pred_region
        %v828 = vld [vmem:[#allocation3] sm:$0xff]
        %v829 = vrcp.pop %v828
        %v830 = vld [vmem:[#allocation4] sm:$0xff]
        %832 = vset.pattern.permute.xlu0 0
        %833 = vperm.xlu0 %832, %v829
        %v834 = vpop.permute.xlu0 %833
        %v836 = vmul.f32 %v830, %v834
        %837 = vset.pattern.permute.xlu0 1
        %838 = vperm.xlu0 %837, %v829
        %v839 = vpop.permute.xlu0 %838
        %v841 = vmul.f32 %v830, %v839
        %842 = vset.pattern.permute.xlu0 2
        %843 = vperm.xlu0 %842, %v829
        %v844 = vpop.permute.xlu0 %843
        %v846 = vmul.f32 %v830, %v844
        %847 = vset.pattern.permute.xlu0 3
        %848 = vperm.xlu0 %847, %v829
        %v849 = vpop.permute.xlu0 %848
        %v851 = vmul.f32 %v830, %v849
        %v852 = vsel %vm273, %v836, %v841
        %vm853 = vcmask 130048
        %v854 = vsel %vm853, %v852, %v846
        %vm855 = vcmask 195584
        %v856 = vsel %vm855, %v854, %v851
        %v857 = vpack.c.bf16 %v856, %v856
        %vm858 = vcmask 257024
        %859 = vst.msk [vmem:[%s259] sm:$0xf] %vm858, %v857
      $region40: #{mixecn_forward.12} parent=31 // pred_fallthru
        _
      %p860 = scmp.lt.s32.totalorder %s19, 1
      %s861 = scalar_select %p860, %s19, 1
      %p862 = scmp.lt.s32.totalorder %s20, 0
      %s863 = scalar_select %p862, %s20, 0
      %s864 = sadd.s32 %s863, %s861
      %s865 = smul.addr %s864, 4
      %s866 = scalar_lea.vmem %s3, %s865
      // Predicated region
      $region41: #{mixecn_forward.12} parent=31 // pred_check
        %p867 = pneg %p137
      $region42: #{mixecn_forward.12} parent=31 // pred_check_branch
        %869 = sbr.rel (%p867) target = $region44
      $region43: #{mixecn_forward.12} parent=31 // pred_region
        _
      $region44: #{mixecn_forward.12} parent=31 // pred_fallthru
        _
    $region32: #{mixecn_forward.12} parent=5 // pred_fallthru
      _
    %p870 = scmp.le.s32.totalorder 2, %s9
    // Predicated region
    $region45: #{mixecn_forward.12} parent=5 // pred_check
      %p871 = pneg %p870
    $region46: #{mixecn_forward.12} parent=5 // pred_check_branch
      %873 = sbr.rel (%p871) target = $region48
    $region47: #{mixecn_forward.12} parent=5 // pred_region
      %s874 = ssub.s32 %s9, 2
      // Predicated region
      $region49: #{mixecn_forward.12} parent=47 // pred_check
        %p875 = pneg %p143
      $region50: #{mixecn_forward.12} parent=47 // pred_check_branch
        %877 = sbr.rel (%p875) target = $region52
      $region51: #{mixecn_forward.12} parent=47 // pred_region
        %p878 = scmp.lt.s32.totalorder %s22, 1
        %s879 = scalar_select %p878, %s22, 1
        %p880 = scmp.lt.s32.totalorder %s23, 0
        %s881 = scalar_select %p880, %s23, 0
        %s882 = sadd.s32 %s881, %s879
        %s883 = smul.addr %s882, 4
        %s884 = scalar_lea.vmem %s3, %s883
      $region52: #{mixecn_forward.12} parent=47 // pred_fallthru
        _
    $region48: #{mixecn_forward.12} parent=5 // pred_fallthru
      _
  $region6: #{mixecn_forward.12} parent=0 // loop_footer
    %s13 = sadd.s32 1, %s9
  $region7: #{mixecn_forward.12} parent=0 // loop_footer_branch
    %8 = sbr.rel target = $region3
  $region8: #{mixecn_forward.12} parent=0 // loop_exit
    _

// kernel: mixecn_forward.14
$region0: #{mixecn_forward.14}
  #allocation0 [shape = 'u32[]', space=smem, size = 0x4, offset = 0x4, fixed_abs, tag = 'smem constant byte address 0x4 - core index']
  #allocation1 [shape = 'u32[144,128]{1,0:T(1,128)}', space=vmem, size = 0x12000, scoped, tag = 'internal scratch']
  %s0 = inlined_call_operand.vmem [shape: bf16[16,32], index: 0, kind: input, shape index: {}]
  %s1 = inlined_call_operand.vmem [shape: f32[1,32], index: 1, kind: input, shape index: {}]
  %s2 = inlined_call_operand.vmem [shape: f32[1,32], index: 2, kind: input, shape index: {}]
  %s3 = inlined_call_operand.vmem [shape: bf16[32,64], index: 3, kind: input, shape index: {}]
  %s4 = inlined_call_operand.vmem [shape: f32[1,64], index: 4, kind: input, shape index: {}]
  %s5 = inlined_call_operand.vmem [shape: bf16[64,32], index: 5, kind: input, shape index: {}]
  %s6 = inlined_call_operand.vmem [shape: f32[1,32], index: 6, kind: input, shape index: {}]
  %s7 = inlined_call_operand.vmem [shape: bf16[16,32], index: 7, kind: output, shape index: {}]
  %s8 = sld [smem:[#allocation0]]
  $region38: #{mixecn_forward.14} parent=0
    _
  %s10 = ssub.s32 1, %s8
  %s11 = scalar_select 0, %s10, %s8
  // Predicated region
  $region2: #{mixecn_forward.14} parent=0 // pred_check
    _
  $region3: #{mixecn_forward.14} parent=0 // pred_check_branch
    %13 = sbr.rel (0) target = $region5
  $region4: #{mixecn_forward.14} parent=0 // pred_region
    _
  $region5: #{mixecn_forward.14} parent=0 // pred_fallthru
    _
  // Predicated region
  $region6: #{mixecn_forward.14} parent=0 // pred_check
    _
  $region7: #{mixecn_forward.14} parent=0 // pred_check_branch
    %15 = sbr.rel (0) target = $region9
  $region8: #{mixecn_forward.14} parent=0 // pred_region
    _
  $region9: #{mixecn_forward.14} parent=0 // pred_fallthru
    _
  // Predicated region
  $region10: #{mixecn_forward.14} parent=0 // pred_check
    _
  $region11: #{mixecn_forward.14} parent=0 // pred_check_branch
    %17 = sbr.rel (0) target = $region13
  $region12: #{mixecn_forward.14} parent=0 // pred_region
    _
  $region13: #{mixecn_forward.14} parent=0 // pred_fallthru
    _
  // Predicated region
  $region14: #{mixecn_forward.14} parent=0 // pred_check
    _
  $region15: #{mixecn_forward.14} parent=0 // pred_check_branch
    %19 = sbr.rel (0) target = $region17
  $region16: #{mixecn_forward.14} parent=0 // pred_region
    _
  $region17: #{mixecn_forward.14} parent=0 // pred_fallthru
    _
  // Predicated region
  $region18: #{mixecn_forward.14} parent=0 // pred_check
    _
  $region19: #{mixecn_forward.14} parent=0 // pred_check_branch
    %21 = sbr.rel (0) target = $region21
  $region20: #{mixecn_forward.14} parent=0 // pred_region
    _
  $region21: #{mixecn_forward.14} parent=0 // pred_fallthru
    _
  // Predicated region
  $region22: #{mixecn_forward.14} parent=0 // pred_check
    _
  $region23: #{mixecn_forward.14} parent=0 // pred_check_branch
    %23 = sbr.rel (0) target = $region25
  $region24: #{mixecn_forward.14} parent=0 // pred_region
    _
  $region25: #{mixecn_forward.14} parent=0 // pred_fallthru
    _
  // Predicated region
  $region26: #{mixecn_forward.14} parent=0 // pred_check
    _
  $region27: #{mixecn_forward.14} parent=0 // pred_check_branch
    %25 = sbr.rel (0) target = $region29
  $region28: #{mixecn_forward.14} parent=0 // pred_region
    _
  $region29: #{mixecn_forward.14} parent=0 // pred_fallthru
    _
  %v27 = vld [vmem:[%s0] sm:$0xf]
  %v28 = vld [vmem:[%s0 + $0x4] sm:$0xf]
  %v29 = vunpack.c.l.bf16 %v27
  %v30 = vunpack.c.l.bf16 %v28
  %vm31 = vcmask 261120
  %v32 = vsel %vm31, %v29, 0.0
  %33 = vadd.xlane.f32.xlu0 %v32
  %v34 = vpop.xlane.xlu0 %33
  %v35 = vsel %vm31, %v30, 0.0
  %36 = vadd.xlane.f32.xlu0 %v35
  %v37 = vpop.xlane.xlu0 %36
  %v38 = vrcp.pop 32.0
  %v39 = vmul.f32 %v34, %v38
  %v40 = vmul.f32 %v37, %v38
  %v41 = vsub.f32 %v29, %v39
  %v42 = vsub.f32 %v30, %v40
  %v43 = vmul.f32 %v41, %v41
  %v44 = vmul.f32 %v42, %v42
  %v45 = vsel %vm31, %v43, 0.0
  %46 = vadd.xlane.f32.xlu0 %v45
  %v47 = vpop.xlane.xlu0 %46
  %v48 = vsel %vm31, %v44, 0.0
  %49 = vadd.xlane.f32.xlu0 %v48
  %v50 = vpop.xlane.xlu0 %49
  %v51 = vmul.f32 %v47, %v38
  %v52 = vmul.f32 %v50, %v38
  %v53 = vadd.f32 %v51, 1e-05
  %v54 = vadd.f32 %v52, 1e-05
  %v55 = vrsqrt.pop %v53
  %v56 = vrsqrt.pop %v54
  %v57 = vmul.f32 %v41, %v55
  %v58 = vmul.f32 %v42, %v56
  %v59 = vld [vmem:[%s1] sm:$0x1]
  %v61 = vlaneseq
  %v62 = vshrl.u32 %v61, 7
  %v63 = vsub.s32 0, %v62
  %v64 = vrot.slane %v59, %v63
  %v66 = vmul.f32 %v57, %v64
  %v67 = vmul.f32 %v58, %v64
  %v68 = vld [vmem:[%s2] sm:$0x1]
  %v70 = vlaneseq
  %v71 = vshrl.u32 %v70, 7
  %v72 = vsub.s32 0, %v71
  %v73 = vrot.slane %v68, %v72
  %v75 = vadd.f32 %v66, %v73
  %v76 = vadd.f32 %v67, %v73
  %v77 = vpack.c.bf16 %v76, %v75
  %v78 = vld [vmem:[%s3] sm:$0xf]
  %v79 = vld [vmem:[%s3 + $0x4] sm:$0xf]
  %v80 = vld [vmem:[%s3 + $0x8] sm:$0xf]
  %v81 = vld [vmem:[%s3 + $0xc] sm:$0xf]
  %v82 = vld [vmem:[%s4] sm:$0x1]
  %v84 = vlaneseq
  %v85 = vshrl.u32 %v84, 7
  %v86 = vsub.s32 0, %v85
  %v87 = vrot.slane %v82, %v86
  %v93 = vunpack.c.l.b16 %v78
  %v94 = vunpack.c.l.b16 %v79
  %v95 = vunpack.c.l.b16 %v80
  %v96 = vunpack.c.l.b16 %v81
  %v97 = vpack.c.b16 %v94, %v93
  %v98 = vpack.c.b16 %v96, %v95
  %v102 = vsel %vm31, %v77, 0
  %104 = vmatprep.subr.bf16.mxu0 0
  %105 = vmatpush1.bf16.msra.mxu0 %v97
  %106 = vmatprep.subr.bf16.mxu0 0
  %107 = vmatpush1.bf16.msra.mxu0 %v98
  %108 = vmatprep.subr.bf16.mxu0 0
  %109 = vmatpush1.bf16.msra.mxu0 0
  %110 = vmatprep.subr.bf16.mxu0 0
  %111 = vmatpush1.bf16.msra.mxu0 0
  %112 = vmatprep.subr.bf16.mxu0 0
  %113 = vmatpush1.bf16.msra.mxu0 0
  %114 = vmatprep.subr.bf16.mxu0 0
  %115 = vmatpush1.bf16.msra.mxu0 0
  %116 = vmatprep.subr.bf16.mxu0 0
  %117 = vmatpush1.bf16.msra.mxu0 0
  %118 = vmatprep.subr.bf16.mxu0 0
  %119 = vmatpush1.bf16.msra.mxu0 0
  %120 = vmatprep.subr.bf16.mxu0 0
  %121 = vmatpush1.bf16.msra.mxu0 0
  %122 = vmatprep.subr.bf16.mxu0 0
  %123 = vmatpush1.bf16.msra.mxu0 0
  %124 = vmatprep.subr.bf16.mxu0 0
  %125 = vmatpush1.bf16.msra.mxu0 0
  %126 = vmatprep.subr.bf16.mxu0 0
  %127 = vmatpush1.bf16.msra.mxu0 0
  %128 = vmatprep.subr.bf16.mxu0 0
  %129 = vmatpush1.bf16.msra.mxu0 0
  %130 = vmatprep.subr.bf16.mxu0 0
  %131 = vmatpush1.bf16.msra.mxu0 0
  %132 = vmatprep.subr.bf16.mxu0 0
  %133 = vmatpush1.bf16.msra.mxu0 0
  %134 = vmatprep.subr.bf16.mxu0 0
  %135 = vmatpush1.bf16.msra.mxu0 0
  %136 = vmatprep.mubr.bf16.mxu0 0
  %137 = vmatmul.mubr.bf16.gmra.mrb[0].mxu0 %v102
  %v138 = vpop.f32.mrb[0].mxu0
  %v139 = vadd.f32 %v87, %v138
  %v140 = vpop.f32.mrb[0].mxu0
  %v141 = vpop.f32.mrb[0].mxu0
  %v142 = vadd.f32 %v87, %v141
  %v143 = vpop.f32.mrb[0].mxu0
  %144 = vdwg.mxu0
  %v145 = vmul.f32 %v139, %v139
  %v146 = vmul.f32 %v142, %v142
  %v147 = vmul.f32 %v139, %v145
  %v148 = vmul.f32 %v142, %v146
  %v149 = vmul.f32 %v147, 0.044715
  %v150 = vmul.f32 %v148, 0.044715
  %v151 = vadd.f32 %v139, %v149
  %v152 = vadd.f32 %v142, %v150
  %v153 = vmul.f32 %v151, 0.7978846
  %v154 = vmul.f32 %v152, 0.7978846
  %v155 = vtanh.pop %v153
  %v156 = vtanh.pop %v154
  %v157 = vadd.f32 %v155, 1.0
  %v158 = vadd.f32 %v156, 1.0
  %v159 = vmul.f32 %v157, 0.5
  %v160 = vmul.f32 %v158, 0.5
  %v161 = vmul.f32 %v139, %v159
  %v162 = vmul.f32 %v142, %v160
  %v163 = vpack.c.bf16 %v162, %v161
  %v164 = vld [vmem:[%s5] sm:$0xf]
  %v165 = vld [vmem:[%s5 + $0x4] sm:$0xf]
  %v166 = vld [vmem:[%s5 + $0x8] sm:$0xf]
  %v167 = vld [vmem:[%s5 + $0xc] sm:$0xf]
  %v168 = vld [vmem:[%s5 + $0x10] sm:$0xf]
  %v169 = vld [vmem:[%s5 + $0x14] sm:$0xf]
  %v170 = vld [vmem:[%s5 + $0x18] sm:$0xf]
  %v171 = vld [vmem:[%s5 + $0x1c] sm:$0xf]
  %v172 = vld [vmem:[%s6] sm:$0x1]
  %v174 = vlaneseq
  %v175 = vshrl.u32 %v174, 7
  %v176 = vsub.s32 0, %v175
  %v177 = vrot.slane %v172, %v176
  %v187 = vunpack.c.l.b16 %v164
  %v188 = vunpack.c.l.b16 %v165
  %v189 = vunpack.c.l.b16 %v166
  %v190 = vunpack.c.l.b16 %v167
  %v191 = vunpack.c.l.b16 %v168
  %v192 = vunpack.c.l.b16 %v169
  %v193 = vunpack.c.l.b16 %v170
  %v194 = vunpack.c.l.b16 %v171
  %v195 = vpack.c.b16 %v188, %v187
  %v196 = vpack.c.b16 %v190, %v189
  %v197 = vpack.c.b16 %v192, %v191
  %v198 = vpack.c.b16 %v194, %v193
  %vm203 = vcmask 523264
  %v205 = vsel %vm203, %v163, 0
  %207 = vmatprep.subr.bf16.mxu0 0
  %208 = vmatpush1.bf16.msra.mxu0 %v195
  %209 = vmatprep.subr.bf16.mxu0 0
  %210 = vmatpush1.bf16.msra.mxu0 %v196
  %211 = vmatprep.subr.bf16.mxu0 0
  %212 = vmatpush1.bf16.msra.mxu0 %v197
  %213 = vmatprep.subr.bf16.mxu0 0
  %214 = vmatpush1.bf16.msra.mxu0 %v198
  %215 = vmatprep.subr.bf16.mxu0 0
  %216 = vmatpush1.bf16.msra.mxu0 0
  %217 = vmatprep.subr.bf16.mxu0 0
  %218 = vmatpush1.bf16.msra.mxu0 0
  %219 = vmatprep.subr.bf16.mxu0 0
  %220 = vmatpush1.bf16.msra.mxu0 0
  %221 = vmatprep.subr.bf16.mxu0 0
  %222 = vmatpush1.bf16.msra.mxu0 0
  %223 = vmatprep.subr.bf16.mxu0 0
  %224 = vmatpush1.bf16.msra.mxu0 0
  %225 = vmatprep.subr.bf16.mxu0 0
  %226 = vmatpush1.bf16.msra.mxu0 0
  %227 = vmatprep.subr.bf16.mxu0 0
  %228 = vmatpush1.bf16.msra.mxu0 0
  %229 = vmatprep.subr.bf16.mxu0 0
  %230 = vmatpush1.bf16.msra.mxu0 0
  %231 = vmatprep.subr.bf16.mxu0 0
  %232 = vmatpush1.bf16.msra.mxu0 0
  %233 = vmatprep.subr.bf16.mxu0 0
  %234 = vmatpush1.bf16.msra.mxu0 0
  %235 = vmatprep.subr.bf16.mxu0 0
  %236 = vmatpush1.bf16.msra.mxu0 0
  %237 = vmatprep.subr.bf16.mxu0 0
  %238 = vmatpush1.bf16.msra.mxu0 0
  %239 = vmatprep.mubr.bf16.mxu0 0
  %240 = vmatmul.mubr.bf16.gmra.mrb[0].mxu0 %v205
  %v241 = vpop.f32.mrb[0].mxu0
  %v242 = vadd.f32 %v177, %v241
  %v243 = vpop.f32.mrb[0].mxu0
  %v244 = vpop.f32.mrb[0].mxu0
  %v245 = vadd.f32 %v177, %v244
  %v246 = vpop.f32.mrb[0].mxu0
  %247 = vdwg.mxu0
  %v248 = vadd.f32 %v242, %v29
  %v249 = vadd.f32 %v245, %v30
  %v250 = vpack.c.bf16 %v249, %v248
  %v252 = vunpack.c.l.b16 %v250
  %v253 = vunpack.c.h.b16 %v250
  %v254 = vpack.c.b16 %v252, %v252
  %v255 = vpack.c.b16 %v253, %v253
  %vm258 = vcmask 257024
  %259 = vst.msk [vmem:[%s7] sm:$0xf] %vm258, %v254
  %260 = vst.msk [vmem:[%s7 + $0x4] sm:$0xf] %vm258, %v255
  // Predicated region
  $region30: #{mixecn_forward.14} parent=0 // pred_check
    _
  $region31: #{mixecn_forward.14} parent=0 // pred_check_branch
    %262 = sbr.rel (0) target = $region33
  $region32: #{mixecn_forward.14} parent=0 // pred_region
    _
  $region33: #{mixecn_forward.14} parent=0 // pred_fallthru
    _
  // Predicated region
  $region34: #{mixecn_forward.14} parent=0 // pred_check
    _
  $region35: #{mixecn_forward.14} parent=0 // pred_check_branch
    %264 = sbr.rel (0) target = $region37
  $region36: #{mixecn_forward.14} parent=0 // pred_region
    _
  $region37: #{mixecn_forward.14} parent=0 // pred_fallthru
    _

// kernel: mixecn_forward.19
$region0: #{mixecn_forward.19}
  #allocation0 [shape = 'u32[]', space=smem, size = 0x4, offset = 0x4, fixed_abs, tag = 'smem constant byte address 0x4 - core index']
  #allocation1 [shape = 'u32[144,128]{1,0:T(1,128)}', space=vmem, size = 0x12000, scoped, tag = 'internal scratch']
  #allocation2 [shape = 'f32[16,8]{1,0:T(8,128)}', space=vmem, size = 0x2000, scoped, tag = 'scratch operand']
  %s0 = inlined_call_operand.vmem [shape: bf16[16,32], index: 0, kind: input, shape index: {}]
  %s1 = inlined_call_operand.vmem [shape: bf16[32,8], index: 1, kind: input, shape index: {}]
  %s2 = inlined_call_operand.vmem [shape: f32[1,8], index: 2, kind: input, shape index: {}]
  %s3 = inlined_call_operand.hbm [shape: bf16[16,8], index: 3, kind: output, shape index: {}]
  %s4 = sld [smem:[#allocation0]]
  $region30: #{mixecn_forward.19} parent=0
    _
  %s6 = ssub.s32 1, %s4
  %s7 = scalar_select 0, %s6, %s4
  $region1: #{mixecn_forward.19} parent=0
    #allocation3 [shape = 'u8[4096]{0}', space=vmem, size = 0x1000, scoped, tag = 'output window, operand 0, single buffered']
    #allocation4 [shape = 's32[1]{0}', space=sflag, size = 0x4, scoped, tag = 'scoped memory for mixecn_forward.19']
    %8 = vsyncpa [#allocation4], 0
    // Predicated region
    $region2: #{mixecn_forward.19} parent=1 // pred_check
      _
    $region3: #{mixecn_forward.19} parent=1 // pred_check_branch
      %10 = sbr.rel (0) target = $region5
    $region4: #{mixecn_forward.19} parent=1 // pred_region
      _
    $region5: #{mixecn_forward.19} parent=1 // pred_fallthru
      _
    // Predicated region
    $region6: #{mixecn_forward.19} parent=1 // pred_check
      _
    $region7: #{mixecn_forward.19} parent=1 // pred_check_branch
      %12 = sbr.rel (0) target = $region9
    $region8: #{mixecn_forward.19} parent=1 // pred_region
      _
    $region9: #{mixecn_forward.19} parent=1 // pred_fallthru
      _
    // Predicated region
    $region10: #{mixecn_forward.19} parent=1 // pred_check
      _
    $region11: #{mixecn_forward.19} parent=1 // pred_check_branch
      %14 = sbr.rel (0) target = $region13
    $region12: #{mixecn_forward.19} parent=1 // pred_region
      _
    $region13: #{mixecn_forward.19} parent=1 // pred_fallthru
      _
    %p16 = scmp.eq.s32.totalorder 0, 0
    // Predicated region
    $region14: #{mixecn_forward.19} parent=1 // pred_check
      %p17 = pneg %p16
    $region15: #{mixecn_forward.19} parent=1 // pred_check_branch
      %19 = sbr.rel (%p17) target = $region17
    $region16: #{mixecn_forward.19} parent=1 // pred_region
      %vm20 = vcmask 64512
      %21 = vst.msk [vmem:[#allocation2] sm:$0xff] %vm20, 0.0
      %22 = vst.msk [vmem:[#allocation2 + $0x8] sm:$0xff] %vm20, 0.0
    $region17: #{mixecn_forward.19} parent=1 // pred_fallthru
      _
    %v23 = vld [vmem:[#allocation2] sm:$0xff]
    %v24 = vld [vmem:[#allocation2 + $0x8] sm:$0xff]
    %v25 = vld [vmem:[%s0] sm:$0xf]
    %v26 = vld [vmem:[%s0 + $0x4] sm:$0xf]
    %v27 = vld [vmem:[%s1] sm:$0xf]
    %v28 = vld [vmem:[%s1 + $0x4] sm:$0xf]
    %v29 = vld [vmem:[%s1 + $0x8] sm:$0xf]
    %v30 = vld [vmem:[%s1 + $0xc] sm:$0xf]
    %v33 = vunpack.c.l.b16 %v25
    %v34 = vunpack.c.l.b16 %v26
    %v35 = vpack.c.b16 %v34, %v33
    %v40 = vunpack.c.l.b16 %v27
    %v41 = vunpack.c.l.b16 %v28
    %v42 = vunpack.c.l.b16 %v29
    %v43 = vunpack.c.l.b16 %v30
    %v44 = vpack.c.b16 %v41, %v40
    %v45 = vpack.c.b16 %v43, %v42
    %vm48 = vcmask 261120
    %v50 = vsel %vm48, %v35, 0
    %52 = vmatprep.subr.bf16.mxu0 0
    %53 = vmatpush1.bf16.msra.mxu0 %v44
    %54 = vmatprep.subr.bf16.mxu0 0
    %55 = vmatpush1.bf16.msra.mxu0 %v45
    %56 = vmatprep.subr.bf16.mxu0 0
    %57 = vmatpush1.bf16.msra.mxu0 0
    %58 = vmatprep.subr.bf16.mxu0 0
    %59 = vmatpush1.bf16.msra.mxu0 0
    %60 = vmatprep.subr.bf16.mxu0 0
    %61 = vmatpush1.bf16.msra.mxu0 0
    %62 = vmatprep.subr.bf16.mxu0 0
    %63 = vmatpush1.bf16.msra.mxu0 0
    %64 = vmatprep.subr.bf16.mxu0 0
    %65 = vmatpush1.bf16.msra.mxu0 0
    %66 = vmatprep.subr.bf16.mxu0 0
    %67 = vmatpush1.bf16.msra.mxu0 0
    %68 = vmatprep.subr.bf16.mxu0 0
    %69 = vmatpush1.bf16.msra.mxu0 0
    %70 = vmatprep.subr.bf16.mxu0 0
    %71 = vmatpush1.bf16.msra.mxu0 0
    %72 = vmatprep.subr.bf16.mxu0 0
    %73 = vmatpush1.bf16.msra.mxu0 0
    %74 = vmatprep.subr.bf16.mxu0 0
    %75 = vmatpush1.bf16.msra.mxu0 0
    %76 = vmatprep.subr.bf16.mxu0 0
    %77 = vmatpush1.bf16.msra.mxu0 0
    %78 = vmatprep.subr.bf16.mxu0 0
    %79 = vmatpush1.bf16.msra.mxu0 0
    %80 = vmatprep.subr.bf16.mxu0 0
    %81 = vmatpush1.bf16.msra.mxu0 0
    %82 = vmatprep.subr.bf16.mxu0 0
    %83 = vmatpush1.bf16.msra.mxu0 0
    %84 = vmatprep.mubr.bf16.mxu0 0
    %85 = vmatmul.mubr.bf16.gmra.mrb[0].mxu0 %v50
    %v86 = vpop.f32.mrb[0].mxu0
    %v87 = vadd.f32 0.0, %v86
    %v88 = vpop.f32.mrb[0].mxu0
    %v89 = vpop.f32.mrb[0].mxu0
    %v90 = vadd.f32 0.0, %v89
    %v91 = vpop.f32.mrb[0].mxu0
    %92 = vdwg.mxu0
    %v93 = vadd.f32 %v23, %v87
    %v94 = vadd.f32 %v24, %v90
    %vm95 = vcmask 64512
    %96 = vst.msk [vmem:[#allocation2] sm:$0xff] %vm95, %v93
    %97 = vst.msk [vmem:[#allocation2 + $0x8] sm:$0xff] %vm95, %v94
    // Predicated region
    $region18: #{mixecn_forward.19} parent=1 // pred_check
      %p98 = pneg %p16
    $region19: #{mixecn_forward.19} parent=1 // pred_check_branch
      %100 = sbr.rel (%p98) target = $region21
    $region20: #{mixecn_forward.19} parent=1 // pred_region
      %v101 = vld [vmem:[#allocation2] sm:$0xff]
      %v102 = vld [vmem:[#allocation2 + $0x8] sm:$0xff]
      %v103 = vld [vmem:[%s2] sm:$0x1]
      %v105 = vlaneseq
      %v106 = vshrl.u32 %v105, 7
      %v107 = vsub.s32 0, %v106
      %v108 = vrot.slane %v103, %v107
      %v110 = vadd.f32 %v101, %v108
      %v111 = vadd.f32 %v102, %v108
      %v112 = vpack.c.bf16 %v111, %v110
      %v114 = vunpack.c.l.b16 %v112
      %v115 = vunpack.c.h.b16 %v112
      %v116 = vpack.c.b16 %v114, %v114
      %v117 = vpack.c.b16 %v115, %v115
      %vm120 = vcmask 60416
      %121 = vst.msk [vmem:[#allocation3] sm:$0xf] %vm120, %v116
      %122 = vst.msk [vmem:[#allocation3 + $0x4] sm:$0xf] %vm120, %v117
    $region21: #{mixecn_forward.19} parent=1 // pred_fallthru
      _
    // Predicated region
    $region22: #{mixecn_forward.19} parent=1 // pred_check
      _
    $region23: #{mixecn_forward.19} parent=1 // pred_check_branch
      %124 = sbr.rel (0) target = $region25
    $region24: #{mixecn_forward.19} parent=1 // pred_region
      %s126 = ssub.s32 128, 128
      %127 = vsyncadd [#allocation4], %s126
      %s128 = sshll.u32 [#allocation3], 4
      %s129 = int_to_ptr.vmem [resolvable:$true] %s128
      %134 = dma.vmem_to_hbm [thread:$0]  %s129, 128, %s3, [#allocation4], 64, 64, 4
    $region25: #{mixecn_forward.19} parent=1 // pred_fallthru
      _
    // Predicated region
    $region26: #{mixecn_forward.19} parent=1 // pred_check
      _
    $region27: #{mixecn_forward.19} parent=1 // pred_check_branch
      %136 = sbr.rel (0) target = $region29
    $region28: #{mixecn_forward.19} parent=1 // pred_region
      %137 = dma.done [#allocation4], 128
    $region29: #{mixecn_forward.19} parent=1 // pred_fallthru
      _
    %138 = vsyncpa [#allocation4], 1

</llo_original>
